<compile_context>
chip_gen: v7x
topology: tpu7x:2x2x1
jax: 0.10.0
libtpu: 0.0.40
codegen_flags: <defaults>
</compile_context>

<pallas_src>
import math
import functools

import jax
import jax.numpy as jnp
from jax.experimental import pallas as pl
from jax.experimental.pallas import tpu as pltpu


def _kg_mha_ff_kernel(x_ref, f_ref, bias_ref,
                      wq_ref, bq_ref, wk_ref, bk_ref, wv_ref, bv_ref,
                      wo_ref, bo_ref,
                      g1_ref, be1_ref, g2_ref, be2_ref,
                      w1_ref, b1_ref, w2_ref, b2_ref,
                      o_ref, *, h, d_k, eps, compute_dtype):
    f32 = jnp.float32
    cdt = compute_dtype

    xb = x_ref[0].astype(f32)          # (tq, D)
    fb = f_ref[0]                      # (Lk, D)

    def layer_norm(v, g_ref, b_ref):   # f32 stats
        mu = jnp.mean(v, axis=-1, keepdims=True)
        var = jnp.mean((v - mu) ** 2, axis=-1, keepdims=True)
        return (v - mu) * jax.lax.rsqrt(var + eps) * g_ref[...] + b_ref[...]

    def split_heads(t):                # (L, h*d_k) -> (h, L, d_k)
        return jnp.swapaxes(t.reshape(t.shape[0], h, d_k), 0, 1)

    # ---- sublayer[0]: x + self_attn(LN(x), feats, feats, bias) ----
    y = layer_norm(xb, g1_ref, be1_ref).astype(cdt)
    fb_c = fb.astype(cdt)

    q = jnp.dot(y,    wq_ref[...], preferred_element_type=f32) + bq_ref[...]
    k = jnp.dot(fb_c, wk_ref[...], preferred_element_type=f32) + bk_ref[...]
    v = jnp.dot(fb_c, wv_ref[...], preferred_element_type=f32) + bv_ref[...]

    qh = split_heads(q.astype(cdt))    # (h, tq, d_k)
    kh = split_heads(k.astype(cdt))    # (h, Lk, d_k)
    vh = split_heads(v.astype(cdt))    # (h, Lk, d_k)

    scale = 1.0 / math.sqrt(d_k)
    s = jnp.einsum('hqd,hkd->hqk', qh, kh,
                   preferred_element_type=f32) * scale
    s = s + bias_ref[0].astype(f32)    # (h, tq, Lk)

    m = jnp.max(s, axis=-1, keepdims=True)
    p = jnp.exp(s - m)
    p = p * pl.reciprocal(jnp.sum(p, axis=-1, keepdims=True), approx=True)

    pv = jnp.einsum('hqk,hkd->hqd', p.astype(cdt), vh,
                    preferred_element_type=f32)          # (h, tq, d_k) f32

    # Output projection folded per head (no lane-axis concat): sum_h pv_h @ Wo_h
    pv_c = pv.astype(cdt)
    attn = jnp.dot(pv_c[0], wo_ref[0], preferred_element_type=f32)
    for hi in range(1, h):             # static loop; leading-dim slices only
        attn = attn + jnp.dot(pv_c[hi], wo_ref[hi],
                              preferred_element_type=f32)
    attn = attn + bo_ref[...]
    x1 = xb + attn

    # ---- sublayer[1]: x1 + FFN(LN(x1)) ----
    y2 = layer_norm(x1, g2_ref, be2_ref).astype(cdt)
    hmid = jnp.maximum(
        jnp.dot(y2, w1_ref[...], preferred_element_type=f32) + b1_ref[...],
        0.0)
    ff = jnp.dot(hmid.astype(cdt), w2_ref[...],
                 preferred_element_type=f32) + b2_ref[...]

    o_ref[0] = (x1 + ff).astype(o_ref.dtype)


def kg_mha_ff(x, feats, bias, params, *, h, eps=1e-6,
              compute_dtype=jnp.bfloat16):
    B, Lq, D = x.shape
    _, Lk, _ = feats.shape
    assert D % h == 0
    d_k = D // h
    d_ff = params["w1"].shape[1]
    f32 = jnp.float32
    cdt = compute_dtype

    # Lq tile: multiples of 128/256 for big sequences, else whole sequence.
    if Lq % 256 == 0:
        tq = 256
    elif Lq % 128 == 0:
        tq = 128
    else:
        tq = Lq
    grid = (B, Lq // tq)

    # MXU weights cast to bf16 once at the wrapper; Wo pre-split per head.
    # Biases / LayerNorm params stay f32 (added to f32 accumulators).
    param_arrays = [
        params["wq"].astype(cdt), params["bq"].astype(f32),
        params["wk"].astype(cdt), params["bk"].astype(f32),
        params["wv"].astype(cdt), params["bv"].astype(f32),
        params["wo"].reshape(h, d_k, D).astype(cdt), params["bo"].astype(f32),
        params["g1"].astype(f32), params["be1"].astype(f32),
        params["g2"].astype(f32), params["be2"].astype(f32),
        params["w1"].astype(cdt), params["b1"].astype(f32),
        params["w2"].astype(cdt), params["b2"].astype(f32),
    ]

    def full_spec(a):
        nd = a.ndim
        return pl.BlockSpec(a.shape, lambda b, qi, nd=nd: (0,) * nd)

    in_specs = [
        pl.BlockSpec((1, tq, D), lambda b, qi: (b, qi, 0)),          # x
        pl.BlockSpec((1, Lk, D), lambda b, qi: (b, 0, 0)),           # feats
        pl.BlockSpec((1, h, tq, Lk), lambda b, qi: (b, 0, qi, 0)),   # bias
    ] + [full_spec(a) for a in param_arrays]

    # Explicit VMEM budget: double-buffered I/O tiles + weights + temporaries.
    io_bytes = 2 * (tq * D * x.dtype.itemsize
                    + Lk * D * feats.dtype.itemsize
                    + h * tq * Lk * bias.dtype.itemsize
                    + tq * D * x.dtype.itemsize)
    w_bytes = sum(a.size * a.dtype.itemsize for a in param_arrays)
    tmp_bytes = 4 * (4 * (tq + Lk) * D + 3 * h * tq * Lk
                     + 2 * tq * d_ff + 4 * tq * D)
    vmem_limit = int(1.25 * (io_bytes + 2 * w_bytes + tmp_bytes))
    vmem_limit = max(vmem_limit, 32 * 1024 * 1024)
    vmem_limit = min(vmem_limit, 96 * 1024 * 1024)

    kernel = functools.partial(_kg_mha_ff_kernel, h=h, d_k=d_k, eps=eps,
                               compute_dtype=cdt)

    return pl.pallas_call(
        kernel,
        out_shape=jax.ShapeDtypeStruct((B, Lq, D), x.dtype),
        grid=grid,
        in_specs=in_specs,
        out_specs=pl.BlockSpec((1, tq, D), lambda b, qi: (b, qi, 0)),
        compiler_params=pltpu.CompilerParams(
            dimension_semantics=("parallel", "parallel"),
            vmem_limit_bytes=vmem_limit),
    )(x, feats, bias, *param_arrays)


def init_params(key, d_model, d_ff):
    ks = jax.random.split(key, 12)
    s = 1.0 / math.sqrt(d_model)
    sf = 1.0 / math.sqrt(d_ff)
    return {
        # 4 attention linears, stored as (in, out) so we compute x @ W + b
        "wq": jax.random.normal(ks[0], (d_model, d_model), jnp.float32) * s,
        "bq": jax.random.normal(ks[1], (1, d_model), jnp.float32) * 0.02,
        "wk": jax.random.normal(ks[2], (d_model, d_model), jnp.float32) * s,
        "bk": jax.random.normal(ks[3], (1, d_model), jnp.float32) * 0.02,
        "wv": jax.random.normal(ks[4], (d_model, d_model), jnp.float32) * s,
        "bv": jax.random.normal(ks[5], (1, d_model), jnp.float32) * 0.02,
        "wo": jax.random.normal(ks[6], (d_model, d_model), jnp.float32) * s,
        "bo": jax.random.normal(ks[7], (1, d_model), jnp.float32) * 0.02,
        # two LayerNorms
        "g1": jnp.ones((1, d_model), jnp.float32),
        "be1": jnp.zeros((1, d_model), jnp.float32),
        "g2": jnp.ones((1, d_model), jnp.float32),
        "be2": jnp.zeros((1, d_model), jnp.float32),
        # position-wise feed-forward
        "w1": jax.random.normal(ks[8], (d_model, d_ff), jnp.float32) * s,
        "b1": jax.random.normal(ks[9], (1, d_ff), jnp.float32) * 0.02,
        "w2": jax.random.normal(ks[10], (d_ff, d_model), jnp.float32) * sf,
        "b2": jax.random.normal(ks[11], (1, d_model), jnp.float32) * 0.02,
    }


def reference(x, feats, bias, p, *, h, eps=1e-6, compute_dtype=jnp.float32):
    """Pure-JAX reference mirroring the PyTorch module (eval mode).

    With compute_dtype=float32 this is exactly the PyTorch math; with bfloat16
    it mirrors the kernel's mixed-precision (bf16 matmul operands, f32 accum).
    """
    B, Lq, D = x.shape
    Lk = feats.shape[1]
    d_k = D // h
    f32 = jnp.float32
    cdt = compute_dtype

    def ln(v, g, b):
        mu = jnp.mean(v, -1, keepdims=True)
        var = jnp.mean((v - mu) ** 2, -1, keepdims=True)
        return (v - mu) / jnp.sqrt(var + eps) * g + b

    def mm(a, w):
        return jnp.dot(a.astype(cdt), w.astype(cdt),
                       preferred_element_type=f32)

    y = ln(x, p["g1"], p["be1"])
    q = (mm(y, p["wq"]) + p["bq"]).reshape(B, Lq, h, d_k).transpose(0, 2, 1, 3)
    k = (mm(feats, p["wk"]) + p["bk"]).reshape(B, Lk, h, d_k).transpose(0, 2, 1, 3)
    v = (mm(feats, p["wv"]) + p["bv"]).reshape(B, Lk, h, d_k).transpose(0, 2, 1, 3)
    s = jnp.einsum("bhqd,bhkd->bhqk", q.astype(cdt), k.astype(cdt),
                   preferred_element_type=f32) / math.sqrt(d_k) + bias
    pattn = jax.nn.softmax(s, axis=-1)
    o = jnp.einsum("bhqk,bhkd->bhqd", pattn.astype(cdt), v.astype(cdt),
                   preferred_element_type=f32)
    o = o.transpose(0, 2, 1, 3).reshape(B, Lq, D)
    o = mm(o, p["wo"]) + p["bo"]
    x1 = x + o
    y2 = ln(x1, p["g2"], p["be2"])
    hmid = jnp.maximum(mm(y2, p["w1"]) + p["b1"], 0.0)
    ff = mm(hmid, p["w2"]) + p["b2"]
    return x1 + ff


if __name__ == "__main__":
    B, Lq, Lk = 2, 8, 8
    d_model, d_ff, h = 32, 64, 4

    key = jax.random.PRNGKey(0)
    kx, kf, kb, kp = jax.random.split(key, 4)
    x = jax.random.normal(kx, (B, Lq, d_model), jnp.float32)
    feats = jax.random.normal(kf, (B, Lk, d_model), jnp.float32)
    bias = 0.1 * jax.random.normal(kb, (B, h, Lq, Lk), jnp.float32)
    params = init_params(kp, d_model, d_ff)

    out = kg_mha_ff(x, feats, bias, params, h=h)
    out = jax.block_until_ready(out)
    assert out.shape == (B, Lq, d_model)

    # Compare against a reference that uses the same mixed-precision policy.
    ref = reference(x, feats, bias, params, h=h, compute_dtype=jnp.bfloat16)
    err = float(jnp.max(jnp.abs(out - ref)))
    assert jnp.allclose(out, ref, atol=2e-2, rtol=2e-2), err

    print("KERNEL_OK")
</pallas_src>

<mosaic_0001>
module attributes {stable_mosaic.version = 11 : i64} {
  func.func @_kg_mha_ff_kernel(%arg0: i32, %arg1: i32, %arg2: memref<1x8x32xf32, #tpu.memory_space<vmem>>, %arg3: memref<1x8x32xf32, #tpu.memory_space<vmem>>, %arg4: memref<1x4x8x8xf32, #tpu.memory_space<vmem>>, %arg5: memref<32x32xbf16, #tpu.memory_space<vmem>>, %arg6: memref<1x32xf32, #tpu.memory_space<vmem>>, %arg7: memref<32x32xbf16, #tpu.memory_space<vmem>>, %arg8: memref<1x32xf32, #tpu.memory_space<vmem>>, %arg9: memref<32x32xbf16, #tpu.memory_space<vmem>>, %arg10: memref<1x32xf32, #tpu.memory_space<vmem>>, %arg11: memref<4x8x32xbf16, #tpu.memory_space<vmem>>, %arg12: memref<1x32xf32, #tpu.memory_space<vmem>>, %arg13: memref<1x32xf32, #tpu.memory_space<vmem>>, %arg14: memref<1x32xf32, #tpu.memory_space<vmem>>, %arg15: memref<1x32xf32, #tpu.memory_space<vmem>>, %arg16: memref<1x32xf32, #tpu.memory_space<vmem>>, %arg17: memref<32x64xbf16, #tpu.memory_space<vmem>>, %arg18: memref<1x64xf32, #tpu.memory_space<vmem>>, %arg19: memref<64x32xbf16, #tpu.memory_space<vmem>>, %arg20: memref<1x32xf32, #tpu.memory_space<vmem>>, %arg21: memref<1x8x32xf32, #tpu.memory_space<vmem>>) attributes {dimension_semantics = [#tpu.dimension_semantics<parallel>, #tpu.dimension_semantics<parallel>], iteration_bounds = array<i64: 2, 1>, scalar_prefetch = 0 : i64, scratch_operands = 0 : i64, tpu.core_type = #tpu.core_type<tc>, window_params = [{transform_indices = @transform_0, window_bounds = array<i64: 1, 8, 32>}, {transform_indices = @transform_1, window_bounds = array<i64: 1, 8, 32>}, {transform_indices = @transform_2, window_bounds = array<i64: 1, 4, 8, 8>}, {pipeline_mode = #tpu.pipeline_mode<synchronous>, transform_indices = @transform_3, window_bounds = array<i64: 32, 32>}, {pipeline_mode = #tpu.pipeline_mode<synchronous>, transform_indices = @transform_4, window_bounds = array<i64: 1, 32>}, {pipeline_mode = #tpu.pipeline_mode<synchronous>, transform_indices = @transform_5, window_bounds = array<i64: 32, 32>}, {pipeline_mode = #tpu.pipeline_mode<synchronous>, transform_indices = @transform_6, window_bounds = array<i64: 1, 32>}, {pipeline_mode = #tpu.pipeline_mode<synchronous>, transform_indices = @transform_7, window_bounds = array<i64: 32, 32>}, {pipeline_mode = #tpu.pipeline_mode<synchronous>, transform_indices = @transform_8, window_bounds = array<i64: 1, 32>}, {pipeline_mode = #tpu.pipeline_mode<synchronous>, transform_indices = @transform_9, window_bounds = array<i64: 4, 8, 32>}, {pipeline_mode = #tpu.pipeline_mode<synchronous>, transform_indices = @transform_10, window_bounds = array<i64: 1, 32>}, {pipeline_mode = #tpu.pipeline_mode<synchronous>, transform_indices = @transform_11, window_bounds = array<i64: 1, 32>}, {pipeline_mode = #tpu.pipeline_mode<synchronous>, transform_indices = @transform_12, window_bounds = array<i64: 1, 32>}, {pipeline_mode = #tpu.pipeline_mode<synchronous>, transform_indices = @transform_13, window_bounds = array<i64: 1, 32>}, {pipeline_mode = #tpu.pipeline_mode<synchronous>, transform_indices = @transform_14, window_bounds = array<i64: 1, 32>}, {pipeline_mode = #tpu.pipeline_mode<synchronous>, transform_indices = @transform_15, window_bounds = array<i64: 32, 64>}, {pipeline_mode = #tpu.pipeline_mode<synchronous>, transform_indices = @transform_16, window_bounds = array<i64: 1, 64>}, {pipeline_mode = #tpu.pipeline_mode<synchronous>, transform_indices = @transform_17, window_bounds = array<i64: 64, 32>}, {pipeline_mode = #tpu.pipeline_mode<synchronous>, transform_indices = @transform_18, window_bounds = array<i64: 1, 32>}, {transform_indices = @transform_19, window_bounds = array<i64: 1, 8, 32>}]} {
    %c0 = arith.constant 0 : index
    %c0_0 = arith.constant 0 : index
    %c0_1 = arith.constant 0 : index
    %0 = vector.load %arg2[%c0, %c0_0, %c0_1] : memref<1x8x32xf32, #tpu.memory_space<vmem>>, vector<1x8x32xf32>
    %1 = vector.shape_cast %0 : vector<1x8x32xf32> to vector<8x32xf32>
    %c0_2 = arith.constant 0 : index
    %c0_3 = arith.constant 0 : index
    %c0_4 = arith.constant 0 : index
    %2 = vector.load %arg3[%c0_2, %c0_3, %c0_4] : memref<1x8x32xf32, #tpu.memory_space<vmem>>, vector<1x8x32xf32>
    %3 = vector.shape_cast %2 : vector<1x8x32xf32> to vector<8x32xf32>
    %cst = arith.constant dense<0.000000e+00> : vector<8xf32>
    %4 = vector.multi_reduction <add>, %1, %cst [1] : vector<8x32xf32> to vector<8xf32>
    %5 = vector.shape_cast %4 : vector<8xf32> to vector<8x1xf32>
    %cst_5 = arith.constant 3.200000e+01 : f32
    %6 = vector.broadcast %cst_5 : f32 to vector<8x1xf32>
    %7 = arith.divf %5, %6 : vector<8x1xf32>
    %8 = vector.broadcast %7 : vector<8x1xf32> to vector<8x32xf32>
    %9 = arith.subf %1, %8 : vector<8x32xf32>
    %10 = arith.mulf %9, %9 : vector<8x32xf32>
    %cst_6 = arith.constant dense<0.000000e+00> : vector<8xf32>
    %11 = vector.multi_reduction <add>, %10, %cst_6 [1] : vector<8x32xf32> to vector<8xf32>
    %12 = vector.shape_cast %11 : vector<8xf32> to vector<8x1xf32>
    %cst_7 = arith.constant 3.200000e+01 : f32
    %13 = vector.broadcast %cst_7 : f32 to vector<8x1xf32>
    %14 = arith.divf %12, %13 : vector<8x1xf32>
    %15 = vector.broadcast %7 : vector<8x1xf32> to vector<8x32xf32>
    %16 = arith.subf %1, %15 : vector<8x32xf32>
    %cst_8 = arith.constant 9.99999997E-7 : f32
    %17 = vector.broadcast %cst_8 : f32 to vector<8x1xf32>
    %18 = arith.addf %14, %17 : vector<8x1xf32>
    %19 = math.rsqrt %18 : vector<8x1xf32>
    %20 = vector.broadcast %19 : vector<8x1xf32> to vector<8x32xf32>
    %21 = arith.mulf %16, %20 : vector<8x32xf32>
    %c0_9 = arith.constant 0 : index
    %c0_10 = arith.constant 0 : index
    %22 = vector.load %arg13[%c0_9, %c0_10] : memref<1x32xf32, #tpu.memory_space<vmem>>, vector<1x32xf32>
    %23 = vector.broadcast %22 : vector<1x32xf32> to vector<8x32xf32>
    %24 = arith.mulf %21, %23 : vector<8x32xf32>
    %c0_11 = arith.constant 0 : index
    %c0_12 = arith.constant 0 : index
    %25 = vector.load %arg14[%c0_11, %c0_12] : memref<1x32xf32, #tpu.memory_space<vmem>>, vector<1x32xf32>
    %26 = vector.broadcast %25 : vector<1x32xf32> to vector<8x32xf32>
    %27 = arith.addf %24, %26 : vector<8x32xf32>
    %28 = arith.truncf %27 : vector<8x32xf32> to vector<8x32xbf16>
    %29 = arith.truncf %3 : vector<8x32xf32> to vector<8x32xbf16>
    %c0_13 = arith.constant 0 : index
    %c0_14 = arith.constant 0 : index
    %30 = vector.load %arg5[%c0_13, %c0_14] : memref<32x32xbf16, #tpu.memory_space<vmem>>, vector<32x32xbf16>
    %cst_15 = arith.constant dense<0.000000e+00> : vector<8x32xf32>
    %31 = tpu.matmul %28, %30, %cst_15 {dimension_numbers = #tpu.dot_dimension_numbers<[1], [0], [0], [1], [0, 0, 1, 1], [], []>} : vector<8x32xbf16>, vector<32x32xbf16>, vector<8x32xf32> -> vector<8x32xf32>
    %c0_16 = arith.constant 0 : index
    %c0_17 = arith.constant 0 : index
    %32 = vector.load %arg6[%c0_16, %c0_17] : memref<1x32xf32, #tpu.memory_space<vmem>>, vector<1x32xf32>
    %33 = vector.broadcast %32 : vector<1x32xf32> to vector<8x32xf32>
    %34 = arith.addf %31, %33 : vector<8x32xf32>
    %c0_18 = arith.constant 0 : index
    %c0_19 = arith.constant 0 : index
    %35 = vector.load %arg7[%c0_18, %c0_19] : memref<32x32xbf16, #tpu.memory_space<vmem>>, vector<32x32xbf16>
    %cst_20 = arith.constant dense<0.000000e+00> : vector<8x32xf32>
    %36 = tpu.matmul %29, %35, %cst_20 {dimension_numbers = #tpu.dot_dimension_numbers<[1], [0], [0], [1], [0, 0, 1, 1], [], []>} : vector<8x32xbf16>, vector<32x32xbf16>, vector<8x32xf32> -> vector<8x32xf32>
    %c0_21 = arith.constant 0 : index
    %c0_22 = arith.constant 0 : index
    %37 = vector.load %arg8[%c0_21, %c0_22] : memref<1x32xf32, #tpu.memory_space<vmem>>, vector<1x32xf32>
    %38 = vector.broadcast %37 : vector<1x32xf32> to vector<8x32xf32>
    %39 = arith.addf %36, %38 : vector<8x32xf32>
    %c0_23 = arith.constant 0 : index
    %c0_24 = arith.constant 0 : index
    %40 = vector.load %arg9[%c0_23, %c0_24] : memref<32x32xbf16, #tpu.memory_space<vmem>>, vector<32x32xbf16>
    %cst_25 = arith.constant dense<0.000000e+00> : vector<8x32xf32>
    %41 = tpu.matmul %29, %40, %cst_25 {dimension_numbers = #tpu.dot_dimension_numbers<[1], [0], [0], [1], [0, 0, 1, 1], [], []>} : vector<8x32xbf16>, vector<32x32xbf16>, vector<8x32xf32> -> vector<8x32xf32>
    %c0_26 = arith.constant 0 : index
    %c0_27 = arith.constant 0 : index
    %42 = vector.load %arg10[%c0_26, %c0_27] : memref<1x32xf32, #tpu.memory_space<vmem>>, vector<1x32xf32>
    %43 = vector.broadcast %42 : vector<1x32xf32> to vector<8x32xf32>
    %44 = arith.addf %41, %43 : vector<8x32xf32>
    %45 = arith.truncf %34 : vector<8x32xf32> to vector<8x32xbf16>
    %46 = vector.shape_cast %45 : vector<8x32xbf16> to vector<8x4x8xbf16>
    %47 = tpu.transpose %46, [1, 0, 2] : vector<8x4x8xbf16> -> vector<4x8x8xbf16>
    %48 = arith.truncf %39 : vector<8x32xf32> to vector<8x32xbf16>
    %49 = vector.shape_cast %48 : vector<8x32xbf16> to vector<8x4x8xbf16>
    %50 = tpu.transpose %49, [1, 0, 2] : vector<8x4x8xbf16> -> vector<4x8x8xbf16>
    %51 = arith.truncf %44 : vector<8x32xf32> to vector<8x32xbf16>
    %52 = vector.shape_cast %51 : vector<8x32xbf16> to vector<8x4x8xbf16>
    %53 = tpu.transpose %52, [1, 0, 2] : vector<8x4x8xbf16> -> vector<4x8x8xbf16>
    "tpu.trace_start"() <{level = 10 : i32, message = "hqd,hkd->hqk"}> : () -> ()
    %cst_28 = arith.constant dense<0.000000e+00> : vector<4x8x8xf32>
    %54 = tpu.matmul %47, %50, %cst_28 {dimension_numbers = #tpu.dot_dimension_numbers<[2], [2], [1], [1], [0, 0, 0, 1, 1, 1], [0], [0]>} : vector<4x8x8xbf16>, vector<4x8x8xbf16>, vector<4x8x8xf32> -> vector<4x8x8xf32>
    "tpu.trace_stop"() : () -> ()
    %cst_29 = arith.constant 0.353553385 : f32
    %55 = vector.broadcast %cst_29 : f32 to vector<4x8x8xf32>
    %56 = arith.mulf %54, %55 : vector<4x8x8xf32>
    %c0_30 = arith.constant 0 : index
    %c0_31 = arith.constant 0 : index
    %c0_32 = arith.constant 0 : index
    %c0_33 = arith.constant 0 : index
    %57 = vector.load %arg4[%c0_30, %c0_31, %c0_32, %c0_33] : memref<1x4x8x8xf32, #tpu.memory_space<vmem>>, vector<1x4x8x8xf32>
    %58 = vector.shape_cast %57 : vector<1x4x8x8xf32> to vector<4x8x8xf32>
    %59 = arith.addf %56, %58 : vector<4x8x8xf32>
    %cst_34 = arith.constant dense<0xFF800000> : vector<4x8xf32>
    %60 = vector.multi_reduction <maximumf>, %59, %cst_34 [2] : vector<4x8x8xf32> to vector<4x8xf32>
    %61 = vector.shape_cast %60 : vector<4x8xf32> to vector<4x8x1xf32>
    %62 = vector.broadcast %61 : vector<4x8x1xf32> to vector<4x8x8xf32>
    %63 = arith.subf %59, %62 : vector<4x8x8xf32>
    %64 = math.exp %63 : vector<4x8x8xf32>
    %cst_35 = arith.constant dense<0.000000e+00> : vector<4x8xf32>
    %65 = vector.multi_reduction <add>, %64, %cst_35 [2] : vector<4x8x8xf32> to vector<4x8xf32>
    %66 = vector.shape_cast %65 : vector<4x8xf32> to vector<4x8x1xf32>
    %67 = tpu.reciprocal %66 {approx = true} : vector<4x8x1xf32> -> vector<4x8x1xf32>
    %68 = vector.broadcast %67 : vector<4x8x1xf32> to vector<4x8x8xf32>
    %69 = arith.mulf %64, %68 : vector<4x8x8xf32>
    %70 = arith.truncf %69 : vector<4x8x8xf32> to vector<4x8x8xbf16>
    "tpu.trace_start"() <{level = 10 : i32, message = "hqk,hkd->hqd"}> : () -> ()
    %cst_36 = arith.constant dense<0.000000e+00> : vector<4x8x8xf32>
    %71 = tpu.matmul %70, %53, %cst_36 {dimension_numbers = #tpu.dot_dimension_numbers<[2], [1], [1], [2], [0, 0, 0, 1, 1, 2], [0], [0]>} : vector<4x8x8xbf16>, vector<4x8x8xbf16>, vector<4x8x8xf32> -> vector<4x8x8xf32>
    "tpu.trace_stop"() : () -> ()
    %72 = arith.truncf %71 : vector<4x8x8xf32> to vector<4x8x8xbf16>
    %73 = vector.extract_strided_slice %72 {offsets = [0, 0, 0], sizes = [1, 8, 8], strides = [1, 1, 1]} : vector<4x8x8xbf16> to vector<1x8x8xbf16>
    %74 = vector.shape_cast %73 : vector<1x8x8xbf16> to vector<8x8xbf16>
    %c0_37 = arith.constant 0 : index
    %c0_38 = arith.constant 0 : index
    %c0_39 = arith.constant 0 : index
    %75 = vector.load %arg11[%c0_37, %c0_38, %c0_39] : memref<4x8x32xbf16, #tpu.memory_space<vmem>>, vector<1x8x32xbf16>
    %76 = vector.shape_cast %75 : vector<1x8x32xbf16> to vector<8x32xbf16>
    %cst_40 = arith.constant dense<0.000000e+00> : vector<8x32xf32>
    %77 = tpu.matmul %74, %76, %cst_40 {dimension_numbers = #tpu.dot_dimension_numbers<[1], [0], [0], [1], [0, 0, 1, 1], [], []>} : vector<8x8xbf16>, vector<8x32xbf16>, vector<8x32xf32> -> vector<8x32xf32>
    %78 = vector.extract_strided_slice %72 {offsets = [1, 0, 0], sizes = [1, 8, 8], strides = [1, 1, 1]} : vector<4x8x8xbf16> to vector<1x8x8xbf16>
    %79 = vector.shape_cast %78 : vector<1x8x8xbf16> to vector<8x8xbf16>
    %c1 = arith.constant 1 : index
    %c0_41 = arith.constant 0 : index
    %c0_42 = arith.constant 0 : index
    %80 = vector.load %arg11[%c1, %c0_41, %c0_42] : memref<4x8x32xbf16, #tpu.memory_space<vmem>>, vector<1x8x32xbf16>
    %81 = vector.shape_cast %80 : vector<1x8x32xbf16> to vector<8x32xbf16>
    %cst_43 = arith.constant dense<0.000000e+00> : vector<8x32xf32>
    %82 = tpu.matmul %79, %81, %cst_43 {dimension_numbers = #tpu.dot_dimension_numbers<[1], [0], [0], [1], [0, 0, 1, 1], [], []>} : vector<8x8xbf16>, vector<8x32xbf16>, vector<8x32xf32> -> vector<8x32xf32>
    %83 = arith.addf %77, %82 : vector<8x32xf32>
    %84 = vector.extract_strided_slice %72 {offsets = [2, 0, 0], sizes = [1, 8, 8], strides = [1, 1, 1]} : vector<4x8x8xbf16> to vector<1x8x8xbf16>
    %85 = vector.shape_cast %84 : vector<1x8x8xbf16> to vector<8x8xbf16>
    %c2 = arith.constant 2 : index
    %c0_44 = arith.constant 0 : index
    %c0_45 = arith.constant 0 : index
    %86 = vector.load %arg11[%c2, %c0_44, %c0_45] : memref<4x8x32xbf16, #tpu.memory_space<vmem>>, vector<1x8x32xbf16>
    %87 = vector.shape_cast %86 : vector<1x8x32xbf16> to vector<8x32xbf16>
    %cst_46 = arith.constant dense<0.000000e+00> : vector<8x32xf32>
    %88 = tpu.matmul %85, %87, %cst_46 {dimension_numbers = #tpu.dot_dimension_numbers<[1], [0], [0], [1], [0, 0, 1, 1], [], []>} : vector<8x8xbf16>, vector<8x32xbf16>, vector<8x32xf32> -> vector<8x32xf32>
    %89 = arith.addf %83, %88 : vector<8x32xf32>
    %90 = vector.extract_strided_slice %72 {offsets = [3, 0, 0], sizes = [1, 8, 8], strides = [1, 1, 1]} : vector<4x8x8xbf16> to vector<1x8x8xbf16>
    %91 = vector.shape_cast %90 : vector<1x8x8xbf16> to vector<8x8xbf16>
    %c3 = arith.constant 3 : index
    %c0_47 = arith.constant 0 : index
    %c0_48 = arith.constant 0 : index
    %92 = vector.load %arg11[%c3, %c0_47, %c0_48] : memref<4x8x32xbf16, #tpu.memory_space<vmem>>, vector<1x8x32xbf16>
    %93 = vector.shape_cast %92 : vector<1x8x32xbf16> to vector<8x32xbf16>
    %cst_49 = arith.constant dense<0.000000e+00> : vector<8x32xf32>
    %94 = tpu.matmul %91, %93, %cst_49 {dimension_numbers = #tpu.dot_dimension_numbers<[1], [0], [0], [1], [0, 0, 1, 1], [], []>} : vector<8x8xbf16>, vector<8x32xbf16>, vector<8x32xf32> -> vector<8x32xf32>
    %95 = arith.addf %89, %94 : vector<8x32xf32>
    %c0_50 = arith.constant 0 : index
    %c0_51 = arith.constant 0 : index
    %96 = vector.load %arg12[%c0_50, %c0_51] : memref<1x32xf32, #tpu.memory_space<vmem>>, vector<1x32xf32>
    %97 = vector.broadcast %96 : vector<1x32xf32> to vector<8x32xf32>
    %98 = arith.addf %95, %97 : vector<8x32xf32>
    %99 = arith.addf %1, %98 : vector<8x32xf32>
    %cst_52 = arith.constant dense<0.000000e+00> : vector<8xf32>
    %100 = vector.multi_reduction <add>, %99, %cst_52 [1] : vector<8x32xf32> to vector<8xf32>
    %101 = vector.shape_cast %100 : vector<8xf32> to vector<8x1xf32>
    %cst_53 = arith.constant 3.200000e+01 : f32
    %102 = vector.broadcast %cst_53 : f32 to vector<8x1xf32>
    %103 = arith.divf %101, %102 : vector<8x1xf32>
    %104 = vector.broadcast %103 : vector<8x1xf32> to vector<8x32xf32>
    %105 = arith.subf %99, %104 : vector<8x32xf32>
    %106 = arith.mulf %105, %105 : vector<8x32xf32>
    %cst_54 = arith.constant dense<0.000000e+00> : vector<8xf32>
    %107 = vector.multi_reduction <add>, %106, %cst_54 [1] : vector<8x32xf32> to vector<8xf32>
    %108 = vector.shape_cast %107 : vector<8xf32> to vector<8x1xf32>
    %cst_55 = arith.constant 3.200000e+01 : f32
    %109 = vector.broadcast %cst_55 : f32 to vector<8x1xf32>
    %110 = arith.divf %108, %109 : vector<8x1xf32>
    %111 = vector.broadcast %103 : vector<8x1xf32> to vector<8x32xf32>
    %112 = arith.subf %99, %111 : vector<8x32xf32>
    %cst_56 = arith.constant 9.99999997E-7 : f32
    %113 = vector.broadcast %cst_56 : f32 to vector<8x1xf32>
    %114 = arith.addf %110, %113 : vector<8x1xf32>
    %115 = math.rsqrt %114 : vector<8x1xf32>
    %116 = vector.broadcast %115 : vector<8x1xf32> to vector<8x32xf32>
    %117 = arith.mulf %112, %116 : vector<8x32xf32>
    %c0_57 = arith.constant 0 : index
    %c0_58 = arith.constant 0 : index
    %118 = vector.load %arg15[%c0_57, %c0_58] : memref<1x32xf32, #tpu.memory_space<vmem>>, vector<1x32xf32>
    %119 = vector.broadcast %118 : vector<1x32xf32> to vector<8x32xf32>
    %120 = arith.mulf %117, %119 : vector<8x32xf32>
    %c0_59 = arith.constant 0 : index
    %c0_60 = arith.constant 0 : index
    %121 = vector.load %arg16[%c0_59, %c0_60] : memref<1x32xf32, #tpu.memory_space<vmem>>, vector<1x32xf32>
    %122 = vector.broadcast %121 : vector<1x32xf32> to vector<8x32xf32>
    %123 = arith.addf %120, %122 : vector<8x32xf32>
    %124 = arith.truncf %123 : vector<8x32xf32> to vector<8x32xbf16>
    %c0_61 = arith.constant 0 : index
    %c0_62 = arith.constant 0 : index
    %125 = vector.load %arg17[%c0_61, %c0_62] : memref<32x64xbf16, #tpu.memory_space<vmem>>, vector<32x64xbf16>
    %cst_63 = arith.constant dense<0.000000e+00> : vector<8x64xf32>
    %126 = tpu.matmul %124, %125, %cst_63 {dimension_numbers = #tpu.dot_dimension_numbers<[1], [0], [0], [1], [0, 0, 1, 1], [], []>} : vector<8x32xbf16>, vector<32x64xbf16>, vector<8x64xf32> -> vector<8x64xf32>
    %c0_64 = arith.constant 0 : index
    %c0_65 = arith.constant 0 : index
    %127 = vector.load %arg18[%c0_64, %c0_65] : memref<1x64xf32, #tpu.memory_space<vmem>>, vector<1x64xf32>
    %128 = vector.broadcast %127 : vector<1x64xf32> to vector<8x64xf32>
    %129 = arith.addf %126, %128 : vector<8x64xf32>
    %cst_66 = arith.constant 0.000000e+00 : f32
    %130 = vector.broadcast %cst_66 : f32 to vector<8x64xf32>
    %131 = arith.maximumf %129, %130 : vector<8x64xf32>
    %132 = arith.truncf %131 : vector<8x64xf32> to vector<8x64xbf16>
    %c0_67 = arith.constant 0 : index
    %c0_68 = arith.constant 0 : index
    %133 = vector.load %arg19[%c0_67, %c0_68] : memref<64x32xbf16, #tpu.memory_space<vmem>>, vector<64x32xbf16>
    %cst_69 = arith.constant dense<0.000000e+00> : vector<8x32xf32>
    %134 = tpu.matmul %132, %133, %cst_69 {dimension_numbers = #tpu.dot_dimension_numbers<[1], [0], [0], [1], [0, 0, 1, 1], [], []>} : vector<8x64xbf16>, vector<64x32xbf16>, vector<8x32xf32> -> vector<8x32xf32>
    %c0_70 = arith.constant 0 : index
    %c0_71 = arith.constant 0 : index
    %135 = vector.load %arg20[%c0_70, %c0_71] : memref<1x32xf32, #tpu.memory_space<vmem>>, vector<1x32xf32>
    %136 = vector.broadcast %135 : vector<1x32xf32> to vector<8x32xf32>
    %137 = arith.addf %134, %136 : vector<8x32xf32>
    %138 = arith.addf %99, %137 : vector<8x32xf32>
    %c0_72 = arith.constant 0 : index
    %c0_73 = arith.constant 0 : index
    %c0_74 = arith.constant 0 : index
    %139 = vector.load %arg21[%c0_72, %c0_73, %c0_74] : memref<1x8x32xf32, #tpu.memory_space<vmem>>, vector<1x8x32xf32>
    %140 = vector.shape_cast %139 : vector<1x8x32xf32> to vector<8x32xf32>
    %141 = vector.shape_cast %138 : vector<8x32xf32> to vector<1x8x32xf32>
    tpu.vector_store %arg21[%c0_72, %c0_73, %c0_74], %141 {strides = array<i32>} : memref<1x8x32xf32, #tpu.memory_space<vmem>>, vector<1x8x32xf32>,
    return
  }
  func.func @transform_0(%arg0: i32, %arg1: i32) -> (i32, i32, i32) {
    %c0_i32 = arith.constant 0 : i32
    %c0_i32_0 = arith.constant 0 : i32
    return %arg0, %arg1, %c0_i32 : i32, i32, i32
  }
  func.func @transform_1(%arg0: i32, %arg1: i32) -> (i32, i32, i32) {
    %c0_i32 = arith.constant 0 : i32
    %c0_i32_0 = arith.constant 0 : i32
    %c0_i32_1 = arith.constant 0 : i32
    return %arg0, %c0_i32, %c0_i32_0 : i32, i32, i32
  }
  func.func @transform_2(%arg0: i32, %arg1: i32) -> (i32, i32, i32, i32) {
    %c0_i32 = arith.constant 0 : i32
    %c0_i32_0 = arith.constant 0 : i32
    %c0_i32_1 = arith.constant 0 : i32
    return %arg0, %c0_i32, %arg1, %c0_i32_0 : i32, i32, i32, i32
  }
  func.func @transform_3(%arg0: i32, %arg1: i32) -> (i32, i32) {
    %c0_i32 = arith.constant 0 : i32
    %c0_i32_0 = arith.constant 0 : i32
    %c0_i32_1 = arith.constant 0 : i32
    return %c0_i32, %c0_i32_0 : i32, i32
  }
  func.func @transform_4(%arg0: i32, %arg1: i32) -> (i32, i32) {
    %c0_i32 = arith.constant 0 : i32
    %c0_i32_0 = arith.constant 0 : i32
    %c0_i32_1 = arith.constant 0 : i32
    return %c0_i32, %c0_i32_0 : i32, i32
  }
  func.func @transform_5(%arg0: i32, %arg1: i32) -> (i32, i32) {
    %c0_i32 = arith.constant 0 : i32
    %c0_i32_0 = arith.constant 0 : i32
    %c0_i32_1 = arith.constant 0 : i32
    return %c0_i32, %c0_i32_0 : i32, i32
  }
  func.func @transform_6(%arg0: i32, %arg1: i32) -> (i32, i32) {
    %c0_i32 = arith.constant 0 : i32
    %c0_i32_0 = arith.constant 0 : i32
    %c0_i32_1 = arith.constant 0 : i32
    return %c0_i32, %c0_i32_0 : i32, i32
  }
  func.func @transform_7(%arg0: i32, %arg1: i32) -> (i32, i32) {
    %c0_i32 = arith.constant 0 : i32
    %c0_i32_0 = arith.constant 0 : i32
    %c0_i32_1 = arith.constant 0 : i32
    return %c0_i32, %c0_i32_0 : i32, i32
  }
  func.func @transform_8(%arg0: i32, %arg1: i32) -> (i32, i32) {
    %c0_i32 = arith.constant 0 : i32
    %c0_i32_0 = arith.constant 0 : i32
    %c0_i32_1 = arith.constant 0 : i32
    return %c0_i32, %c0_i32_0 : i32, i32
  }
  func.func @transform_9(%arg0: i32, %arg1: i32) -> (i32, i32, i32) {
    %c0_i32 = arith.constant 0 : i32
    %c0_i32_0 = arith.constant 0 : i32
    %c0_i32_1 = arith.constant 0 : i32
    %c0_i32_2 = arith.constant 0 : i32
    return %c0_i32, %c0_i32_0, %c0_i32_1 : i32, i32, i32
  }
  func.func @transform_10(%arg0: i32, %arg1: i32) -> (i32, i32) {
    %c0_i32 = arith.constant 0 : i32
    %c0_i32_0 = arith.constant 0 : i32
    %c0_i32_1 = arith.constant 0 : i32
    return %c0_i32, %c0_i32_0 : i32, i32
  }
  func.func @transform_11(%arg0: i32, %arg1: i32) -> (i32, i32) {
    %c0_i32 = arith.constant 0 : i32
    %c0_i32_0 = arith.constant 0 : i32
    %c0_i32_1 = arith.constant 0 : i32
    return %c0_i32, %c0_i32_0 : i32, i32
  }
  func.func @transform_12(%arg0: i32, %arg1: i32) -> (i32, i32) {
    %c0_i32 = arith.constant 0 : i32
    %c0_i32_0 = arith.constant 0 : i32
    %c0_i32_1 = arith.constant 0 : i32
    return %c0_i32, %c0_i32_0 : i32, i32
  }
  func.func @transform_13(%arg0: i32, %arg1: i32) -> (i32, i32) {
    %c0_i32 = arith.constant 0 : i32
    %c0_i32_0 = arith.constant 0 : i32
    %c0_i32_1 = arith.constant 0 : i32
    return %c0_i32, %c0_i32_0 : i32, i32
  }
  func.func @transform_14(%arg0: i32, %arg1: i32) -> (i32, i32) {
    %c0_i32 = arith.constant 0 : i32
    %c0_i32_0 = arith.constant 0 : i32
    %c0_i32_1 = arith.constant 0 : i32
    return %c0_i32, %c0_i32_0 : i32, i32
  }
  func.func @transform_15(%arg0: i32, %arg1: i32) -> (i32, i32) {
    %c0_i32 = arith.constant 0 : i32
    %c0_i32_0 = arith.constant 0 : i32
    %c0_i32_1 = arith.constant 0 : i32
    return %c0_i32, %c0_i32_0 : i32, i32
  }
  func.func @transform_16(%arg0: i32, %arg1: i32) -> (i32, i32) {
    %c0_i32 = arith.constant 0 : i32
    %c0_i32_0 = arith.constant 0 : i32
    %c0_i32_1 = arith.constant 0 : i32
    return %c0_i32, %c0_i32_0 : i32, i32
  }
  func.func @transform_17(%arg0: i32, %arg1: i32) -> (i32, i32) {
    %c0_i32 = arith.constant 0 : i32
    %c0_i32_0 = arith.constant 0 : i32
    %c0_i32_1 = arith.constant 0 : i32
    return %c0_i32, %c0_i32_0 : i32, i32
  }
  func.func @transform_18(%arg0: i32, %arg1: i32) -> (i32, i32) {
    %c0_i32 = arith.constant 0 : i32
    %c0_i32_0 = arith.constant 0 : i32
    %c0_i32_1 = arith.constant 0 : i32
    return %c0_i32, %c0_i32_0 : i32, i32
  }
  func.func @transform_19(%arg0: i32, %arg1: i32) -> (i32, i32, i32) {
    %c0_i32 = arith.constant 0 : i32
    %c0_i32_0 = arith.constant 0 : i32
    return %arg0, %arg1, %c0_i32 : i32, i32, i32
  }
}

</mosaic_0001>

<llo_original>
// kernel: tpu_custom_call.1
$region0: #{tpu_custom_call.1}
  #allocation0 [shape = 'u32[]', space=smem, size = 0x4, offset = 0x4, fixed_abs, tag = 'smem constant byte address 0x4 - core index']
  #allocation1 [shape = 'u32[144,128]{1,0:T(1,128)}', space=vmem, size = 0x12000, scoped, tag = 'internal scratch']
  %s0 = inlined_call_operand.vmem [shape: f32[2,8,32], index: 0, kind: input, shape index: {}]
  %s1 = inlined_call_operand.vmem [shape: f32[2,8,32], index: 1, kind: input, shape index: {}]
  %s2 = inlined_call_operand.hbm [shape: f32[2,4,8,8], index: 2, kind: input, shape index: {}]
  %s3 = inlined_call_operand.vmem [shape: bf16[32,32], index: 3, kind: input, shape index: {}]
  %s4 = inlined_call_operand.vmem [shape: f32[1,32], index: 4, kind: input, shape index: {}]
  %s5 = inlined_call_operand.hbm [shape: bf16[32,32], index: 5, kind: input, shape index: {}]
  %s6 = inlined_call_operand.hbm [shape: f32[1,32], index: 6, kind: input, shape index: {}]
  %s7 = inlined_call_operand.hbm [shape: bf16[32,32], index: 7, kind: input, shape index: {}]
  %s8 = inlined_call_operand.hbm [shape: f32[1,32], index: 8, kind: input, shape index: {}]
  %s9 = inlined_call_operand.vmem [shape: bf16[4,8,32], index: 9, kind: input, shape index: {}]
  %s10 = inlined_call_operand.hbm [shape: f32[1,32], index: 10, kind: input, shape index: {}]
  %s11 = inlined_call_operand.hbm [shape: f32[1,32], index: 11, kind: input, shape index: {}]
  %s12 = inlined_call_operand.hbm [shape: f32[1,32], index: 12, kind: input, shape index: {}]
  %s13 = inlined_call_operand.hbm [shape: f32[1,32], index: 13, kind: input, shape index: {}]
  %s14 = inlined_call_operand.vmem [shape: f32[1,32], index: 14, kind: input, shape index: {}]
  %s15 = inlined_call_operand.vmem [shape: bf16[32,64], index: 15, kind: input, shape index: {}]
  %s16 = inlined_call_operand.vmem [shape: f32[1,64], index: 16, kind: input, shape index: {}]
  %s17 = inlined_call_operand.vmem [shape: bf16[64,32], index: 17, kind: input, shape index: {}]
  %s18 = inlined_call_operand.vmem [shape: f32[1,32], index: 18, kind: input, shape index: {}]
  %s19 = inlined_call_operand.hbm [shape: f32[2,8,32], index: 19, kind: output, shape index: {}]
  %s20 = sld [smem:[#allocation0]]
  $region145: #{tpu_custom_call.1} parent=0
    _
  %s22 = ssub.s32 1, %s20
  %s23 = scalar_select 0, %s22, %s20
  $region1: #{tpu_custom_call.1} parent=0
    #allocation2 [shape = 'u8[32768]{0}', space=vmem, size = 0x8000, scoped, tag = 'input window, operand 2']
    #allocation3 [shape = 's32[2]{0}', space=sflag, size = 0x8, scoped, tag = 'scoped memory for tpu_custom_call.1']
    #allocation4 [shape = 's32[2]{0}', space=sflag, size = 0x8, scoped, tag = 'scoped memory for tpu_custom_call.1']
    #allocation5 [shape = 'u8[8192]{0}', space=vmem, size = 0x2000, scoped, tag = 'input window, operand 5, single buffered']
    #allocation6 [shape = 's32[1]{0}', space=sflag, size = 0x4, scoped, tag = 'scoped memory for tpu_custom_call.1']
    #allocation7 [shape = 'u8[512]{0}', space=vmem, size = 0x400, scoped, tag = 'input window, operand 6, single buffered']
    #allocation8 [shape = 'u8[8192]{0}', space=vmem, size = 0x2000, scoped, tag = 'input window, operand 7, single buffered']
    #allocation9 [shape = 's32[1]{0}', space=sflag, size = 0x4, scoped, tag = 'scoped memory for tpu_custom_call.1']
    #allocation10 [shape = 'u8[512]{0}', space=vmem, size = 0x400, scoped, tag = 'input window, operand 8, single buffered']
    #allocation11 [shape = 'u8[512]{0}', space=vmem, size = 0x400, scoped, tag = 'input window, operand 10, single buffered']
    #allocation12 [shape = 's32[1]{0}', space=sflag, size = 0x4, scoped, tag = 'scoped memory for tpu_custom_call.1']
    #allocation13 [shape = 'u8[512]{0}', space=vmem, size = 0x400, scoped, tag = 'input window, operand 11, single buffered']
    #allocation14 [shape = 'u8[512]{0}', space=vmem, size = 0x400, scoped, tag = 'input window, operand 12, single buffered']
    #allocation15 [shape = 's32[1]{0}', space=sflag, size = 0x4, scoped, tag = 'scoped memory for tpu_custom_call.1']
    #allocation16 [shape = 'u8[512]{0}', space=vmem, size = 0x400, scoped, tag = 'input window, operand 13, single buffered']
    #allocation17 [shape = 'u8[8192]{0}', space=vmem, size = 0x2000, scoped, tag = 'output window, operand 0']
    %24 = vsyncpa [#allocation3], 0
    %s25 = scalar_lea.sflag [#allocation3], 1
    %26 = vsyncpa %s25, 0
    %27 = vsyncpa [#allocation6], 0
    %28 = vsyncpa [#allocation9], 0
    %29 = vsyncpa [#allocation12], 0
    %30 = vsyncpa [#allocation15], 0
    %31 = vsyncpa [#allocation4], 0
    %s32 = scalar_lea.sflag [#allocation4], 1
    %33 = vsyncpa %s32, 0
    loop: start=0, step=1, limit=4
    $region2: #{tpu_custom_call.1} parent=1 // loop_pre_header
      _
    $region3: #{tpu_custom_call.1} parent=1 // loop_header
      %s35 = sphi 0, %s39
      %p36 = scmp.ge.s32.totalorder %s35, 4
      %s42 = sphi 0, %s54
      %s43 = sphi 0, %s50
      %s44 = sphi 0, %s42
      %s45 = sphi 0, %s43
      %s46 = sphi 0, %s44
      %s47 = sphi 0, %s45
      %s59 = sphi 0, %s61
      %s62 = sphi 0, %s59
      %s63 = sphi 0, %s62
      %s79 = sphi 0, %s63
      %s85 = sphi 0, %s87
      %s88 = sphi 0, %s85
      %s89 = sphi 0, %s88
      %s105 = sphi 0, %s89
      %s113 = sphi 0, %s115
      %s116 = sphi 0, %s113
      %s117 = sphi 0, %s116
      %s133 = sphi 0, %s117
      %s137 = sphi 0, %s137
      %s139 = sphi 0, %s137
      %s140 = sphi 0, %s139
      %s154 = sphi 0, %s140
      %s158 = sphi 0, %s158
      %s160 = sphi 0, %s158
      %s161 = sphi 0, %s160
      %s175 = sphi 0, %s161
      %s179 = sphi 0, %s179
      %s181 = sphi 0, %s179
      %s182 = sphi 0, %s181
      %s196 = sphi 0, %s182
      %s200 = sphi 0, %s200
      %s202 = sphi 0, %s200
      %s203 = sphi 0, %s202
      %s217 = sphi 0, %s203
      %s221 = sphi 0, %s221
      %s223 = sphi 0, %s221
      %s224 = sphi 0, %s223
      %s238 = sphi 0, %s224
      %s242 = sphi 0, %s242
      %s244 = sphi 0, %s242
      %s245 = sphi 0, %s244
      %s259 = sphi 0, %s245
      %s263 = sphi 0, %s263
      %s265 = sphi 0, %s263
      %s266 = sphi 0, %s265
      %s280 = sphi 0, %s266
      %s284 = sphi 0, %s284
      %s286 = sphi 0, %s284
      %s287 = sphi 0, %s286
      %s301 = sphi 0, %s287
      %s305 = sphi 0, %s305
      %s307 = sphi 0, %s305
      %s308 = sphi 0, %s307
      %s322 = sphi 0, %s308
      %s326 = sphi 0, %s326
      %s328 = sphi 0, %s326
      %s329 = sphi 0, %s328
      %s343 = sphi 0, %s329
      %s347 = sphi 0, %s347
      %s349 = sphi 0, %s347
      %s350 = sphi 0, %s349
      %s364 = sphi 0, %s350
      %s368 = sphi 0, %s368
      %s370 = sphi 0, %s368
      %s371 = sphi 0, %s370
      %s385 = sphi 0, %s371
      %s389 = sphi 0, %s389
      %s391 = sphi 0, %s389
      %s392 = sphi 0, %s391
      %s406 = sphi 0, %s392
      %s410 = sphi 0, %s410
      %s412 = sphi 0, %s410
      %s413 = sphi 0, %s412
      %s427 = sphi 0, %s413
      %s431 = sphi 0, %s431
      %s433 = sphi 0, %s431
      %s434 = sphi 0, %s433
      %s448 = sphi 0, %s434
      %s452 = sphi 0, %s452
      %s454 = sphi 0, %s452
      %s455 = sphi 0, %s454
      %s469 = sphi 0, %s455
      %s477 = sphi 0, %s479
      %s480 = sphi 0, %s477
      %s481 = sphi 0, %s480
      %s497 = sphi 0, %s481
    $region4: #{tpu_custom_call.1} parent=1 // loop_header_branch
      %38 = sbr.rel (%p36) target = $region8
    $region5: #{tpu_custom_call.1} parent=1 // loop_body
      %s40 = ssub.s32 %s35, 1
      %s41 = ssub.s32 %s35, 2
      %s48 = sadd.s32 1, %s43
      %p49 = scmp.ge.s32.totalorder %s48, 1
      %s50 = scalar_select %p49, 0, %s48
      %s51 = sadd.s32 1, %s42
      %s52 = scalar_select %p49, %s51, %s42
      %p53 = scmp.ge.s32.totalorder %s52, 2
      %s54 = scalar_select %p53, 0, %s52
      %s55 = ssub.s32 %s42, %s54
      %s56 = ssub.s32 %s43, %s50
      %s57 = sor.u32 %s55, %s56
      %p58 = scmp.eq.s32.totalorder %s57, 0
      %s60 = sadd.s32 %s59, 1
      %s61 = scalar_select %p58, %s59, %s60
      %p64 = pneg %p58
      %p65 = scmp.eq.s32.totalorder %s35, 1
      %p66 = por %p64, %p65
      %p67 = scmp.ne.s32.totalorder %s59, %s62
      %p68 = scmp.eq.s32.totalorder %s35, 0
      %p69 = por %p67, %p68
      %p70 = scmp.ne.s32.totalorder %s59, %s62
      %p71 = scmp.eq.s32.totalorder %s40, 1
      %p72 = por %p70, %p71
      %p73 = scmp.ne.s32.totalorder %s62, %s63
      %p74 = scmp.eq.s32.totalorder %s40, 0
      %p75 = por %p73, %p74
      %p76 = scmp.ne.s32.totalorder %s62, %s63
      %p77 = scmp.eq.s32.totalorder %s41, 1
      %p78 = por %p76, %p77
      %p80 = scmp.ne.s32.totalorder %s63, %s79
      %p81 = scmp.eq.s32.totalorder %s41, 0
      %p82 = por %p80, %p81
      %s83 = ssub.s32 %s42, %s54
      %p84 = scmp.eq.s32.totalorder %s83, 0
      %s86 = sadd.s32 %s85, 1
      %s87 = scalar_select %p84, %s85, %s86
      %p90 = pneg %p84
      %p91 = scmp.eq.s32.totalorder %s35, 1
      %p92 = por %p90, %p91
      %p93 = scmp.ne.s32.totalorder %s85, %s88
      %p94 = scmp.eq.s32.totalorder %s35, 0
      %p95 = por %p93, %p94
      %p96 = scmp.ne.s32.totalorder %s85, %s88
      %p97 = scmp.eq.s32.totalorder %s40, 1
      %p98 = por %p96, %p97
      %p99 = scmp.ne.s32.totalorder %s88, %s89
      %p100 = scmp.eq.s32.totalorder %s40, 0
      %p101 = por %p99, %p100
      %p102 = scmp.ne.s32.totalorder %s88, %s89
      %p103 = scmp.eq.s32.totalorder %s41, 1
      %p104 = por %p102, %p103
      %p106 = scmp.ne.s32.totalorder %s89, %s105
      %p107 = scmp.eq.s32.totalorder %s41, 0
      %p108 = por %p106, %p107
      %s109 = ssub.s32 %s42, %s54
      %s110 = ssub.s32 %s43, %s50
      %s111 = sor.u32 %s109, %s110
      %p112 = scmp.eq.s32.totalorder %s111, 0
      %s114 = sadd.s32 %s113, 1
      %s115 = scalar_select %p112, %s113, %s114
      %p118 = pneg %p112
      %p119 = scmp.eq.s32.totalorder %s35, 1
      %p120 = por %p118, %p119
      %p121 = scmp.ne.s32.totalorder %s113, %s116
      %p122 = scmp.eq.s32.totalorder %s35, 0
      %p123 = por %p121, %p122
      %p124 = scmp.ne.s32.totalorder %s113, %s116
      %p125 = scmp.eq.s32.totalorder %s40, 1
      %p126 = por %p124, %p125
      %p127 = scmp.ne.s32.totalorder %s116, %s117
      %p128 = scmp.eq.s32.totalorder %s40, 0
      %p129 = por %p127, %p128
      %p130 = scmp.ne.s32.totalorder %s116, %s117
      %p131 = scmp.eq.s32.totalorder %s41, 1
      %p132 = por %p130, %p131
      %p134 = scmp.ne.s32.totalorder %s117, %s133
      %p135 = scmp.eq.s32.totalorder %s41, 0
      %p136 = por %p134, %p135
      %s138 = sadd.s32 %s137, 1
      %p141 = scmp.eq.s32.totalorder %s35, 1
      %p142 = scmp.ne.s32.totalorder %s137, %s139
      %p143 = scmp.eq.s32.totalorder %s35, 0
      %p144 = por %p142, %p143
      %p145 = scmp.ne.s32.totalorder %s137, %s139
      %p146 = scmp.eq.s32.totalorder %s40, 1
      %p147 = por %p145, %p146
      %p148 = scmp.ne.s32.totalorder %s139, %s140
      %p149 = scmp.eq.s32.totalorder %s40, 0
      %p150 = por %p148, %p149
      %p151 = scmp.ne.s32.totalorder %s139, %s140
      %p152 = scmp.eq.s32.totalorder %s41, 1
      %p153 = por %p151, %p152
      %p155 = scmp.ne.s32.totalorder %s140, %s154
      %p156 = scmp.eq.s32.totalorder %s41, 0
      %p157 = por %p155, %p156
      %s159 = sadd.s32 %s158, 1
      %p162 = scmp.eq.s32.totalorder %s35, 1
      %p163 = scmp.ne.s32.totalorder %s158, %s160
      %p164 = scmp.eq.s32.totalorder %s35, 0
      %p165 = por %p163, %p164
      %p166 = scmp.ne.s32.totalorder %s158, %s160
      %p167 = scmp.eq.s32.totalorder %s40, 1
      %p168 = por %p166, %p167
      %p169 = scmp.ne.s32.totalorder %s160, %s161
      %p170 = scmp.eq.s32.totalorder %s40, 0
      %p171 = por %p169, %p170
      %p172 = scmp.ne.s32.totalorder %s160, %s161
      %p173 = scmp.eq.s32.totalorder %s41, 1
      %p174 = por %p172, %p173
      %p176 = scmp.ne.s32.totalorder %s161, %s175
      %p177 = scmp.eq.s32.totalorder %s41, 0
      %p178 = por %p176, %p177
      %s180 = sadd.s32 %s179, 1
      %p183 = scmp.eq.s32.totalorder %s35, 1
      %p184 = scmp.ne.s32.totalorder %s179, %s181
      %p185 = scmp.eq.s32.totalorder %s35, 0
      %p186 = por %p184, %p185
      %p187 = scmp.ne.s32.totalorder %s179, %s181
      %p188 = scmp.eq.s32.totalorder %s40, 1
      %p189 = por %p187, %p188
      %p190 = scmp.ne.s32.totalorder %s181, %s182
      %p191 = scmp.eq.s32.totalorder %s40, 0
      %p192 = por %p190, %p191
      %p193 = scmp.ne.s32.totalorder %s181, %s182
      %p194 = scmp.eq.s32.totalorder %s41, 1
      %p195 = por %p193, %p194
      %p197 = scmp.ne.s32.totalorder %s182, %s196
      %p198 = scmp.eq.s32.totalorder %s41, 0
      %p199 = por %p197, %p198
      %s201 = sadd.s32 %s200, 1
      %p204 = scmp.eq.s32.totalorder %s35, 1
      %p205 = scmp.ne.s32.totalorder %s200, %s202
      %p206 = scmp.eq.s32.totalorder %s35, 0
      %p207 = por %p205, %p206
      %p208 = scmp.ne.s32.totalorder %s200, %s202
      %p209 = scmp.eq.s32.totalorder %s40, 1
      %p210 = por %p208, %p209
      %p211 = scmp.ne.s32.totalorder %s202, %s203
      %p212 = scmp.eq.s32.totalorder %s40, 0
      %p213 = por %p211, %p212
      %p214 = scmp.ne.s32.totalorder %s202, %s203
      %p215 = scmp.eq.s32.totalorder %s41, 1
      %p216 = por %p214, %p215
      %p218 = scmp.ne.s32.totalorder %s203, %s217
      %p219 = scmp.eq.s32.totalorder %s41, 0
      %p220 = por %p218, %p219
      %s222 = sadd.s32 %s221, 1
      %p225 = scmp.eq.s32.totalorder %s35, 1
      %p226 = scmp.ne.s32.totalorder %s221, %s223
      %p227 = scmp.eq.s32.totalorder %s35, 0
      %p228 = por %p226, %p227
      %p229 = scmp.ne.s32.totalorder %s221, %s223
      %p230 = scmp.eq.s32.totalorder %s40, 1
      %p231 = por %p229, %p230
      %p232 = scmp.ne.s32.totalorder %s223, %s224
      %p233 = scmp.eq.s32.totalorder %s40, 0
      %p234 = por %p232, %p233
      %p235 = scmp.ne.s32.totalorder %s223, %s224
      %p236 = scmp.eq.s32.totalorder %s41, 1
      %p237 = por %p235, %p236
      %p239 = scmp.ne.s32.totalorder %s224, %s238
      %p240 = scmp.eq.s32.totalorder %s41, 0
      %p241 = por %p239, %p240
      %s243 = sadd.s32 %s242, 1
      %p246 = scmp.eq.s32.totalorder %s35, 1
      %p247 = scmp.ne.s32.totalorder %s242, %s244
      %p248 = scmp.eq.s32.totalorder %s35, 0
      %p249 = por %p247, %p248
      %p250 = scmp.ne.s32.totalorder %s242, %s244
      %p251 = scmp.eq.s32.totalorder %s40, 1
      %p252 = por %p250, %p251
      %p253 = scmp.ne.s32.totalorder %s244, %s245
      %p254 = scmp.eq.s32.totalorder %s40, 0
      %p255 = por %p253, %p254
      %p256 = scmp.ne.s32.totalorder %s244, %s245
      %p257 = scmp.eq.s32.totalorder %s41, 1
      %p258 = por %p256, %p257
      %p260 = scmp.ne.s32.totalorder %s245, %s259
      %p261 = scmp.eq.s32.totalorder %s41, 0
      %p262 = por %p260, %p261
      %s264 = sadd.s32 %s263, 1
      %p267 = scmp.eq.s32.totalorder %s35, 1
      %p268 = scmp.ne.s32.totalorder %s263, %s265
      %p269 = scmp.eq.s32.totalorder %s35, 0
      %p270 = por %p268, %p269
      %p271 = scmp.ne.s32.totalorder %s263, %s265
      %p272 = scmp.eq.s32.totalorder %s40, 1
      %p273 = por %p271, %p272
      %p274 = scmp.ne.s32.totalorder %s265, %s266
      %p275 = scmp.eq.s32.totalorder %s40, 0
      %p276 = por %p274, %p275
      %p277 = scmp.ne.s32.totalorder %s265, %s266
      %p278 = scmp.eq.s32.totalorder %s41, 1
      %p279 = por %p277, %p278
      %p281 = scmp.ne.s32.totalorder %s266, %s280
      %p282 = scmp.eq.s32.totalorder %s41, 0
      %p283 = por %p281, %p282
      %s285 = sadd.s32 %s284, 1
      %p288 = scmp.eq.s32.totalorder %s35, 1
      %p289 = scmp.ne.s32.totalorder %s284, %s286
      %p290 = scmp.eq.s32.totalorder %s35, 0
      %p291 = por %p289, %p290
      %p292 = scmp.ne.s32.totalorder %s284, %s286
      %p293 = scmp.eq.s32.totalorder %s40, 1
      %p294 = por %p292, %p293
      %p295 = scmp.ne.s32.totalorder %s286, %s287
      %p296 = scmp.eq.s32.totalorder %s40, 0
      %p297 = por %p295, %p296
      %p298 = scmp.ne.s32.totalorder %s286, %s287
      %p299 = scmp.eq.s32.totalorder %s41, 1
      %p300 = por %p298, %p299
      %p302 = scmp.ne.s32.totalorder %s287, %s301
      %p303 = scmp.eq.s32.totalorder %s41, 0
      %p304 = por %p302, %p303
      %s306 = sadd.s32 %s305, 1
      %p309 = scmp.eq.s32.totalorder %s35, 1
      %p310 = scmp.ne.s32.totalorder %s305, %s307
      %p311 = scmp.eq.s32.totalorder %s35, 0
      %p312 = por %p310, %p311
      %p313 = scmp.ne.s32.totalorder %s305, %s307
      %p314 = scmp.eq.s32.totalorder %s40, 1
      %p315 = por %p313, %p314
      %p316 = scmp.ne.s32.totalorder %s307, %s308
      %p317 = scmp.eq.s32.totalorder %s40, 0
      %p318 = por %p316, %p317
      %p319 = scmp.ne.s32.totalorder %s307, %s308
      %p320 = scmp.eq.s32.totalorder %s41, 1
      %p321 = por %p319, %p320
      %p323 = scmp.ne.s32.totalorder %s308, %s322
      %p324 = scmp.eq.s32.totalorder %s41, 0
      %p325 = por %p323, %p324
      %s327 = sadd.s32 %s326, 1
      %p330 = scmp.eq.s32.totalorder %s35, 1
      %p331 = scmp.ne.s32.totalorder %s326, %s328
      %p332 = scmp.eq.s32.totalorder %s35, 0
      %p333 = por %p331, %p332
      %p334 = scmp.ne.s32.totalorder %s326, %s328
      %p335 = scmp.eq.s32.totalorder %s40, 1
      %p336 = por %p334, %p335
      %p337 = scmp.ne.s32.totalorder %s328, %s329
      %p338 = scmp.eq.s32.totalorder %s40, 0
      %p339 = por %p337, %p338
      %p340 = scmp.ne.s32.totalorder %s328, %s329
      %p341 = scmp.eq.s32.totalorder %s41, 1
      %p342 = por %p340, %p341
      %p344 = scmp.ne.s32.totalorder %s329, %s343
      %p345 = scmp.eq.s32.totalorder %s41, 0
      %p346 = por %p344, %p345
      %s348 = sadd.s32 %s347, 1
      %p351 = scmp.eq.s32.totalorder %s35, 1
      %p352 = scmp.ne.s32.totalorder %s347, %s349
      %p353 = scmp.eq.s32.totalorder %s35, 0
      %p354 = por %p352, %p353
      %p355 = scmp.ne.s32.totalorder %s347, %s349
      %p356 = scmp.eq.s32.totalorder %s40, 1
      %p357 = por %p355, %p356
      %p358 = scmp.ne.s32.totalorder %s349, %s350
      %p359 = scmp.eq.s32.totalorder %s40, 0
      %p360 = por %p358, %p359
      %p361 = scmp.ne.s32.totalorder %s349, %s350
      %p362 = scmp.eq.s32.totalorder %s41, 1
      %p363 = por %p361, %p362
      %p365 = scmp.ne.s32.totalorder %s350, %s364
      %p366 = scmp.eq.s32.totalorder %s41, 0
      %p367 = por %p365, %p366
      %s369 = sadd.s32 %s368, 1
      %p372 = scmp.eq.s32.totalorder %s35, 1
      %p373 = scmp.ne.s32.totalorder %s368, %s370
      %p374 = scmp.eq.s32.totalorder %s35, 0
      %p375 = por %p373, %p374
      %p376 = scmp.ne.s32.totalorder %s368, %s370
      %p377 = scmp.eq.s32.totalorder %s40, 1
      %p378 = por %p376, %p377
      %p379 = scmp.ne.s32.totalorder %s370, %s371
      %p380 = scmp.eq.s32.totalorder %s40, 0
      %p381 = por %p379, %p380
      %p382 = scmp.ne.s32.totalorder %s370, %s371
      %p383 = scmp.eq.s32.totalorder %s41, 1
      %p384 = por %p382, %p383
      %p386 = scmp.ne.s32.totalorder %s371, %s385
      %p387 = scmp.eq.s32.totalorder %s41, 0
      %p388 = por %p386, %p387
      %s390 = sadd.s32 %s389, 1
      %p393 = scmp.eq.s32.totalorder %s35, 1
      %p394 = scmp.ne.s32.totalorder %s389, %s391
      %p395 = scmp.eq.s32.totalorder %s35, 0
      %p396 = por %p394, %p395
      %p397 = scmp.ne.s32.totalorder %s389, %s391
      %p398 = scmp.eq.s32.totalorder %s40, 1
      %p399 = por %p397, %p398
      %p400 = scmp.ne.s32.totalorder %s391, %s392
      %p401 = scmp.eq.s32.totalorder %s40, 0
      %p402 = por %p400, %p401
      %p403 = scmp.ne.s32.totalorder %s391, %s392
      %p404 = scmp.eq.s32.totalorder %s41, 1
      %p405 = por %p403, %p404
      %p407 = scmp.ne.s32.totalorder %s392, %s406
      %p408 = scmp.eq.s32.totalorder %s41, 0
      %p409 = por %p407, %p408
      %s411 = sadd.s32 %s410, 1
      %p414 = scmp.eq.s32.totalorder %s35, 1
      %p415 = scmp.ne.s32.totalorder %s410, %s412
      %p416 = scmp.eq.s32.totalorder %s35, 0
      %p417 = por %p415, %p416
      %p418 = scmp.ne.s32.totalorder %s410, %s412
      %p419 = scmp.eq.s32.totalorder %s40, 1
      %p420 = por %p418, %p419
      %p421 = scmp.ne.s32.totalorder %s412, %s413
      %p422 = scmp.eq.s32.totalorder %s40, 0
      %p423 = por %p421, %p422
      %p424 = scmp.ne.s32.totalorder %s412, %s413
      %p425 = scmp.eq.s32.totalorder %s41, 1
      %p426 = por %p424, %p425
      %p428 = scmp.ne.s32.totalorder %s413, %s427
      %p429 = scmp.eq.s32.totalorder %s41, 0
      %p430 = por %p428, %p429
      %s432 = sadd.s32 %s431, 1
      %p435 = scmp.eq.s32.totalorder %s35, 1
      %p436 = scmp.ne.s32.totalorder %s431, %s433
      %p437 = scmp.eq.s32.totalorder %s35, 0
      %p438 = por %p436, %p437
      %p439 = scmp.ne.s32.totalorder %s431, %s433
      %p440 = scmp.eq.s32.totalorder %s40, 1
      %p441 = por %p439, %p440
      %p442 = scmp.ne.s32.totalorder %s433, %s434
      %p443 = scmp.eq.s32.totalorder %s40, 0
      %p444 = por %p442, %p443
      %p445 = scmp.ne.s32.totalorder %s433, %s434
      %p446 = scmp.eq.s32.totalorder %s41, 1
      %p447 = por %p445, %p446
      %p449 = scmp.ne.s32.totalorder %s434, %s448
      %p450 = scmp.eq.s32.totalorder %s41, 0
      %p451 = por %p449, %p450
      %s453 = sadd.s32 %s452, 1
      %p456 = scmp.eq.s32.totalorder %s35, 1
      %p457 = scmp.ne.s32.totalorder %s452, %s454
      %p458 = scmp.eq.s32.totalorder %s35, 0
      %p459 = por %p457, %p458
      %p460 = scmp.ne.s32.totalorder %s452, %s454
      %p461 = scmp.eq.s32.totalorder %s40, 1
      %p462 = por %p460, %p461
      %p463 = scmp.ne.s32.totalorder %s454, %s455
      %p464 = scmp.eq.s32.totalorder %s40, 0
      %p465 = por %p463, %p464
      %p466 = scmp.ne.s32.totalorder %s454, %s455
      %p467 = scmp.eq.s32.totalorder %s41, 1
      %p468 = por %p466, %p467
      %p470 = scmp.ne.s32.totalorder %s455, %s469
      %p471 = scmp.eq.s32.totalorder %s41, 0
      %p472 = por %p470, %p471
      %s473 = ssub.s32 %s42, %s54
      %s474 = ssub.s32 %s43, %s50
      %s475 = sor.u32 %s473, %s474
      %p476 = scmp.eq.s32.totalorder %s475, 0
      %s478 = sadd.s32 %s477, 1
      %s479 = scalar_select %p476, %s477, %s478
      %p482 = pneg %p476
      %p483 = scmp.eq.s32.totalorder %s35, 1
      %p484 = por %p482, %p483
      %p485 = scmp.ne.s32.totalorder %s477, %s480
      %p486 = scmp.eq.s32.totalorder %s35, 0
      %p487 = por %p485, %p486
      %p488 = scmp.ne.s32.totalorder %s477, %s480
      %p489 = scmp.eq.s32.totalorder %s40, 1
      %p490 = por %p488, %p489
      %p491 = scmp.ne.s32.totalorder %s480, %s481
      %p492 = scmp.eq.s32.totalorder %s40, 0
      %p493 = por %p491, %p492
      %p494 = scmp.ne.s32.totalorder %s480, %s481
      %p495 = scmp.eq.s32.totalorder %s41, 1
      %p496 = por %p494, %p495
      %p498 = scmp.ne.s32.totalorder %s481, %s497
      %p499 = scmp.eq.s32.totalorder %s41, 0
      %p500 = por %p498, %p499
      %p501 = scmp.le.s32.totalorder 1, %s35
      %p502 = scmp.lt.s32.totalorder %s35, 3
      %p503 = pnand %p501, %p502
      %p504 = pneg %p503
      // Predicated region
      $region9: #{tpu_custom_call.1} parent=5 // pred_check
        _
      $region10: #{tpu_custom_call.1} parent=5 // pred_check_branch
        %506 = sbr.rel (%p503) target = $region12
      $region11: #{tpu_custom_call.1} parent=5 // pred_region
        %s507 = ssub.s32 %s35, 1
        // Predicated region
        $region13: #{tpu_custom_call.1} parent=11 // pred_check
          %p508 = pneg %p150
        $region14: #{tpu_custom_call.1} parent=11 // pred_check_branch
          %510 = sbr.rel (%p508) target = $region16
        $region15: #{tpu_custom_call.1} parent=11 // pred_region
          _
        $region16: #{tpu_custom_call.1} parent=11 // pred_fallthru
          _
        // Predicated region
        $region17: #{tpu_custom_call.1} parent=11 // pred_check
          %p511 = pneg %p171
        $region18: #{tpu_custom_call.1} parent=11 // pred_check_branch
          %513 = sbr.rel (%p511) target = $region20
        $region19: #{tpu_custom_call.1} parent=11 // pred_region
          _
        $region20: #{tpu_custom_call.1} parent=11 // pred_fallthru
          _
        // Predicated region
        $region21: #{tpu_custom_call.1} parent=11 // pred_check
          %p514 = pneg %p192
        $region22: #{tpu_custom_call.1} parent=11 // pred_check_branch
          %516 = sbr.rel (%p514) target = $region24
        $region23: #{tpu_custom_call.1} parent=11 // pred_region
          %s518 = ssub.s32 256, 256
          %519 = vsyncadd [#allocation6], %s518
          %s520 = sshll.u32 [#allocation5], 4
          %s521 = int_to_ptr.vmem [resolvable:$true] %s520
          %526 = dma.hbm_to_vmem [thread:$0]  %s5, 256, %s521, [#allocation6], 64, 64, 4
        $region24: #{tpu_custom_call.1} parent=11 // pred_fallthru
          _
        // Predicated region
        $region25: #{tpu_custom_call.1} parent=11 // pred_check
          %p527 = pneg %p213
        $region26: #{tpu_custom_call.1} parent=11 // pred_check_branch
          %529 = sbr.rel (%p527) target = $region28
        $region27: #{tpu_custom_call.1} parent=11 // pred_region
          %s531 = ssub.s32 16, 16
          %532 = vsyncadd [#allocation6], %s531
          %s534 = sshll.u32 [#allocation7], 4
          %s535 = int_to_ptr.vmem [resolvable:$true] %s534
          %537 = dma.hbm_to_vmem [thread:$0]  %s6, 16, %s535, [#allocation6]
        $region28: #{tpu_custom_call.1} parent=11 // pred_fallthru
          _
        // Predicated region
        $region29: #{tpu_custom_call.1} parent=11 // pred_check
          %p538 = pneg %p234
        $region30: #{tpu_custom_call.1} parent=11 // pred_check_branch
          %540 = sbr.rel (%p538) target = $region32
        $region31: #{tpu_custom_call.1} parent=11 // pred_region
          %s542 = ssub.s32 256, 256
          %543 = vsyncadd [#allocation9], %s542
          %s544 = sshll.u32 [#allocation8], 4
          %s545 = int_to_ptr.vmem [resolvable:$true] %s544
          %550 = dma.hbm_to_vmem [thread:$0]  %s7, 256, %s545, [#allocation9], 64, 64, 4
        $region32: #{tpu_custom_call.1} parent=11 // pred_fallthru
          _
        // Predicated region
        $region33: #{tpu_custom_call.1} parent=11 // pred_check
          %p551 = pneg %p255
        $region34: #{tpu_custom_call.1} parent=11 // pred_check_branch
          %553 = sbr.rel (%p551) target = $region36
        $region35: #{tpu_custom_call.1} parent=11 // pred_region
          %s555 = ssub.s32 16, 16
          %556 = vsyncadd [#allocation9], %s555
          %s558 = sshll.u32 [#allocation10], 4
          %s559 = int_to_ptr.vmem [resolvable:$true] %s558
          %561 = dma.hbm_to_vmem [thread:$0]  %s8, 16, %s559, [#allocation9]
        $region36: #{tpu_custom_call.1} parent=11 // pred_fallthru
          _
        // Predicated region
        $region37: #{tpu_custom_call.1} parent=11 // pred_check
          %p562 = pneg %p276
        $region38: #{tpu_custom_call.1} parent=11 // pred_check_branch
          %564 = sbr.rel (%p562) target = $region40
        $region39: #{tpu_custom_call.1} parent=11 // pred_region
          _
        $region40: #{tpu_custom_call.1} parent=11 // pred_fallthru
          _
        // Predicated region
        $region41: #{tpu_custom_call.1} parent=11 // pred_check
          %p565 = pneg %p297
        $region42: #{tpu_custom_call.1} parent=11 // pred_check_branch
          %567 = sbr.rel (%p565) target = $region44
        $region43: #{tpu_custom_call.1} parent=11 // pred_region
          %s569 = ssub.s32 16, 16
          %570 = vsyncadd [#allocation12], %s569
          %s572 = sshll.u32 [#allocation11], 4
          %s573 = int_to_ptr.vmem [resolvable:$true] %s572
          %575 = dma.hbm_to_vmem [thread:$0]  %s10, 16, %s573, [#allocation12]
        $region44: #{tpu_custom_call.1} parent=11 // pred_fallthru
          _
        // Predicated region
        $region45: #{tpu_custom_call.1} parent=11 // pred_check
          %p576 = pneg %p318
        $region46: #{tpu_custom_call.1} parent=11 // pred_check_branch
          %578 = sbr.rel (%p576) target = $region48
        $region47: #{tpu_custom_call.1} parent=11 // pred_region
          %s580 = ssub.s32 16, 16
          %581 = vsyncadd [#allocation12], %s580
          %s583 = sshll.u32 [#allocation13], 4
          %s584 = int_to_ptr.vmem [resolvable:$true] %s583
          %586 = dma.hbm_to_vmem [thread:$0]  %s11, 16, %s584, [#allocation12]
        $region48: #{tpu_custom_call.1} parent=11 // pred_fallthru
          _
        // Predicated region
        $region49: #{tpu_custom_call.1} parent=11 // pred_check
          %p587 = pneg %p339
        $region50: #{tpu_custom_call.1} parent=11 // pred_check_branch
          %589 = sbr.rel (%p587) target = $region52
        $region51: #{tpu_custom_call.1} parent=11 // pred_region
          %s591 = ssub.s32 16, 16
          %592 = vsyncadd [#allocation15], %s591
          %s594 = sshll.u32 [#allocation14], 4
          %s595 = int_to_ptr.vmem [resolvable:$true] %s594
          %597 = dma.hbm_to_vmem [thread:$0]  %s12, 16, %s595, [#allocation15]
        $region52: #{tpu_custom_call.1} parent=11 // pred_fallthru
          _
        // Predicated region
        $region53: #{tpu_custom_call.1} parent=11 // pred_check
          %p598 = pneg %p360
        $region54: #{tpu_custom_call.1} parent=11 // pred_check_branch
          %600 = sbr.rel (%p598) target = $region56
        $region55: #{tpu_custom_call.1} parent=11 // pred_region
          %s602 = ssub.s32 16, 16
          %603 = vsyncadd [#allocation15], %s602
          %s605 = sshll.u32 [#allocation16], 4
          %s606 = int_to_ptr.vmem [resolvable:$true] %s605
          %608 = dma.hbm_to_vmem [thread:$0]  %s13, 16, %s606, [#allocation15]
        $region56: #{tpu_custom_call.1} parent=11 // pred_fallthru
          _
        // Predicated region
        $region57: #{tpu_custom_call.1} parent=11 // pred_check
          %p609 = pneg %p381
        $region58: #{tpu_custom_call.1} parent=11 // pred_check_branch
          %611 = sbr.rel (%p609) target = $region60
        $region59: #{tpu_custom_call.1} parent=11 // pred_region
          _
        $region60: #{tpu_custom_call.1} parent=11 // pred_fallthru
          _
        // Predicated region
        $region61: #{tpu_custom_call.1} parent=11 // pred_check
          %p612 = pneg %p402
        $region62: #{tpu_custom_call.1} parent=11 // pred_check_branch
          %614 = sbr.rel (%p612) target = $region64
        $region63: #{tpu_custom_call.1} parent=11 // pred_region
          _
        $region64: #{tpu_custom_call.1} parent=11 // pred_fallthru
          _
        // Predicated region
        $region65: #{tpu_custom_call.1} parent=11 // pred_check
          %p615 = pneg %p423
        $region66: #{tpu_custom_call.1} parent=11 // pred_check_branch
          %617 = sbr.rel (%p615) target = $region68
        $region67: #{tpu_custom_call.1} parent=11 // pred_region
          _
        $region68: #{tpu_custom_call.1} parent=11 // pred_fallthru
          _
        // Predicated region
        $region69: #{tpu_custom_call.1} parent=11 // pred_check
          %p618 = pneg %p444
        $region70: #{tpu_custom_call.1} parent=11 // pred_check_branch
          %620 = sbr.rel (%p618) target = $region72
        $region71: #{tpu_custom_call.1} parent=11 // pred_region
          _
        $region72: #{tpu_custom_call.1} parent=11 // pred_fallthru
          _
        // Predicated region
        $region73: #{tpu_custom_call.1} parent=11 // pred_check
          %p621 = pneg %p465
        $region74: #{tpu_custom_call.1} parent=11 // pred_check_branch
          %623 = sbr.rel (%p621) target = $region76
        $region75: #{tpu_custom_call.1} parent=11 // pred_region
          _
        $region76: #{tpu_custom_call.1} parent=11 // pred_fallthru
          _
      $region12: #{tpu_custom_call.1} parent=5 // pred_fallthru
        _
      %p624 = scmp.lt.s32.totalorder %s35, 2
      // Predicated region
      $region77: #{tpu_custom_call.1} parent=5 // pred_check
        %p625 = pneg %p624
      $region78: #{tpu_custom_call.1} parent=5 // pred_check_branch
        %627 = sbr.rel (%p625) target = $region80
      $region79: #{tpu_custom_call.1} parent=5 // pred_region
        // Predicated region
        $region81: #{tpu_custom_call.1} parent=79 // pred_check
          %p628 = pneg %p69
        $region82: #{tpu_custom_call.1} parent=79 // pred_check_branch
          %630 = sbr.rel (%p628) target = $region84
        $region83: #{tpu_custom_call.1} parent=79 // pred_region
          %p631 = scmp.lt.s32.totalorder %s42, 1
          %s632 = scalar_select %p631, %s42, 1
          %p633 = scmp.lt.s32.totalorder %s43, 0
          %s634 = scalar_select %p633, %s43, 0
          %s635 = sadd.s32 %s634, %s632
          %s636 = smul.addr %s635, 8
          %s637 = scalar_lea.vmem %s0, %s636
        $region84: #{tpu_custom_call.1} parent=79 // pred_fallthru
          _
        // Predicated region
        $region85: #{tpu_custom_call.1} parent=79 // pred_check
          %p638 = pneg %p95
        $region86: #{tpu_custom_call.1} parent=79 // pred_check_branch
          %640 = sbr.rel (%p638) target = $region88
        $region87: #{tpu_custom_call.1} parent=79 // pred_region
          %p641 = scmp.lt.s32.totalorder %s42, 1
          %s642 = scalar_select %p641, %s42, 1
          %s643 = smul.addr %s642, 8
          %s644 = scalar_lea.vmem %s1, %s643
        $region88: #{tpu_custom_call.1} parent=79 // pred_fallthru
          _
        // Predicated region
        $region89: #{tpu_custom_call.1} parent=79 // pred_check
          %p645 = pneg %p123
        $region90: #{tpu_custom_call.1} parent=79 // pred_check_branch
          %647 = sbr.rel (%p645) target = $region92
        $region91: #{tpu_custom_call.1} parent=79 // pred_region
          %s648 = sand.u32 %s113, 1
          %s649 = scalar_lea.sflag [#allocation3], %s648
          %s650 = sand.u32 %s113, 1
          %s651 = smul.addr %s650, 32
          %s652 = scalar_lea.vmem [#allocation2], %s651
          %s654 = ssub.s32 512, 512
          %655 = vsyncadd %s649, %s654
          %s656 = smul.addr %s42, 4
          %s657 = sadd.s32 %s43, %s656
          %s658 = smul.addr %s657, 128
          %s659 = scalar_lea.hbm %s2, %s658
          %s660 = sshll.u32 %s652, 4
          %s661 = int_to_ptr.vmem [resolvable:$true] %s660
          %666 = dma.hbm_to_vmem [thread:$0]  %s659, 512, %s661, %s649, 128, 128, 8
        $region92: #{tpu_custom_call.1} parent=79 // pred_fallthru
          _
      $region80: #{tpu_custom_call.1} parent=5 // pred_fallthru
        _
      %p667 = scmp.le.s32.totalorder 1, %s35
      %p668 = scmp.lt.s32.totalorder %s35, 3
      %p669 = pnand %p667, %p668
      %p670 = pneg %p669
      // Predicated region
      $region93: #{tpu_custom_call.1} parent=5 // pred_check
        _
      $region94: #{tpu_custom_call.1} parent=5 // pred_check_branch
        %672 = sbr.rel (%p669) target = $region96
      $region95: #{tpu_custom_call.1} parent=5 // pred_region
        %s673 = ssub.s32 %s35, 1
        %s674 = sand.u32 %s116, 1
        %s675 = scalar_lea.sflag [#allocation3], %s674
        %s676 = sand.u32 %s116, 1
        %s677 = smul.addr %s676, 32
        %s678 = scalar_lea.vmem [#allocation2], %s677
        // Predicated region
        $region97: #{tpu_custom_call.1} parent=95 // pred_check
          %p679 = pneg %p129
        $region98: #{tpu_custom_call.1} parent=95 // pred_check_branch
          %681 = sbr.rel (%p679) target = $region100
        $region99: #{tpu_custom_call.1} parent=95 // pred_region
          %682 = dma.done %s675, 512
        $region100: #{tpu_custom_call.1} parent=95 // pred_fallthru
          _
        // Predicated region
        $region101: #{tpu_custom_call.1} parent=95 // pred_check
          %p683 = pneg %p192
        $region102: #{tpu_custom_call.1} parent=95 // pred_check_branch
          %685 = sbr.rel (%p683) target = $region104
        $region103: #{tpu_custom_call.1} parent=95 // pred_region
          %686 = dma.done [#allocation6], 256
        $region104: #{tpu_custom_call.1} parent=95 // pred_fallthru
          _
        // Predicated region
        $region105: #{tpu_custom_call.1} parent=95 // pred_check
          %p687 = pneg %p213
        $region106: #{tpu_custom_call.1} parent=95 // pred_check_branch
          %689 = sbr.rel (%p687) target = $region108
        $region107: #{tpu_custom_call.1} parent=95 // pred_region
          %690 = dma.done [#allocation6], 16
        $region108: #{tpu_custom_call.1} parent=95 // pred_fallthru
          _
        // Predicated region
        $region109: #{tpu_custom_call.1} parent=95 // pred_check
          %p691 = pneg %p234
        $region110: #{tpu_custom_call.1} parent=95 // pred_check_branch
          %693 = sbr.rel (%p691) target = $region112
        $region111: #{tpu_custom_call.1} parent=95 // pred_region
          %694 = dma.done [#allocation9], 256
        $region112: #{tpu_custom_call.1} parent=95 // pred_fallthru
          _
        // Predicated region
        $region113: #{tpu_custom_call.1} parent=95 // pred_check
          %p695 = pneg %p255
        $region114: #{tpu_custom_call.1} parent=95 // pred_check_branch
          %697 = sbr.rel (%p695) target = $region116
        $region115: #{tpu_custom_call.1} parent=95 // pred_region
          %698 = dma.done [#allocation9], 16
        $region116: #{tpu_custom_call.1} parent=95 // pred_fallthru
          _
        // Predicated region
        $region117: #{tpu_custom_call.1} parent=95 // pred_check
          %p699 = pneg %p297
        $region118: #{tpu_custom_call.1} parent=95 // pred_check_branch
          %701 = sbr.rel (%p699) target = $region120
        $region119: #{tpu_custom_call.1} parent=95 // pred_region
          %702 = dma.done [#allocation12], 16
        $region120: #{tpu_custom_call.1} parent=95 // pred_fallthru
          _
        // Predicated region
        $region121: #{tpu_custom_call.1} parent=95 // pred_check
          %p703 = pneg %p318
        $region122: #{tpu_custom_call.1} parent=95 // pred_check_branch
          %705 = sbr.rel (%p703) target = $region124
        $region123: #{tpu_custom_call.1} parent=95 // pred_region
          %706 = dma.done [#allocation12], 16
        $region124: #{tpu_custom_call.1} parent=95 // pred_fallthru
          _
        // Predicated region
        $region125: #{tpu_custom_call.1} parent=95 // pred_check
          %p707 = pneg %p339
        $region126: #{tpu_custom_call.1} parent=95 // pred_check_branch
          %709 = sbr.rel (%p707) target = $region128
        $region127: #{tpu_custom_call.1} parent=95 // pred_region
          %710 = dma.done [#allocation15], 16
        $region128: #{tpu_custom_call.1} parent=95 // pred_fallthru
          _
        // Predicated region
        $region129: #{tpu_custom_call.1} parent=95 // pred_check
          %p711 = pneg %p360
        $region130: #{tpu_custom_call.1} parent=95 // pred_check_branch
          %713 = sbr.rel (%p711) target = $region132
        $region131: #{tpu_custom_call.1} parent=95 // pred_region
          %714 = dma.done [#allocation15], 16
        $region132: #{tpu_custom_call.1} parent=95 // pred_fallthru
          _
        %p715 = scmp.lt.s32.totalorder %s44, 1
        %s716 = scalar_select %p715, %s44, 1
        %p717 = scmp.lt.s32.totalorder %s45, 0
        %s718 = scalar_select %p717, %s45, 0
        %s719 = sadd.s32 %s718, %s716
        %s720 = smul.addr %s719, 8
        %s721 = scalar_lea.vmem %s0, %s720
        %p722 = pneg %p75
        %p723 = pneg %p72
        %p724 = scmp.lt.s32.totalorder %s44, 1
        %s725 = scalar_select %p724, %s44, 1
        %s726 = smul.addr %s725, 8
        %s727 = scalar_lea.vmem %s1, %s726
        %p728 = pneg %p101
        %p729 = pneg %p98
        %s730 = sand.u32 %s116, 1
        %s731 = scalar_lea.sflag [#allocation3], %s730
        %s732 = sand.u32 %s116, 1
        %s733 = smul.addr %s732, 32
        %s734 = scalar_lea.vmem [#allocation2], %s733
        %p735 = pneg %p129
        %p736 = pneg %p126
        %p737 = pneg %p150
        %p738 = pneg %p147
        %p739 = pneg %p171
        %p740 = pneg %p168
        %p741 = pneg %p192
        %p742 = pneg %p189
        %p743 = pneg %p213
        %p744 = pneg %p210
        %p745 = pneg %p234
        %p746 = pneg %p231
        %p747 = pneg %p255
        %p748 = pneg %p252
        %p749 = pneg %p276
        %p750 = pneg %p273
        %p751 = pneg %p297
        %p752 = pneg %p294
        %p753 = pneg %p318
        %p754 = pneg %p315
        %p755 = pneg %p339
        %p756 = pneg %p336
        %p757 = pneg %p360
        %p758 = pneg %p357
        %p759 = pneg %p381
        %p760 = pneg %p378
        %p761 = pneg %p402
        %p762 = pneg %p399
        %p763 = pneg %p423
        %p764 = pneg %p420
        %p765 = pneg %p444
        %p766 = pneg %p441
        %p767 = pneg %p465
        %p768 = pneg %p462
        %p769 = pneg %p493
        %p770 = pneg %p490
        %s771 = sand.u32 %s480, 1
        %s772 = scalar_lea.sflag [#allocation4], %s771
        %s773 = sand.u32 %s480, 1
        %s774 = smul.addr %s773, 8
        %s775 = scalar_lea.vmem [#allocation17], %s774
        %p776 = scmp.lt.s32.totalorder %s44, 1
        %s777 = scalar_select %p776, %s44, 1
        %p778 = scmp.lt.s32.totalorder %s45, 0
        %s779 = scalar_select %p778, %s45, 0
        %s780 = sadd.s32 %s779, %s777
        %s781 = smul.addr %s780, 8
        %s782 = scalar_lea.vmem %s0, %s781
        %p783 = scmp.lt.s32.totalorder %s44, 1
        %s784 = scalar_select %p783, %s44, 1
        %s785 = smul.addr %s784, 8
        %s786 = scalar_lea.vmem %s1, %s785
        %v788 = vld [vmem:[%s782] sm:$0xff]
        %v789 = vld [vmem:[%s786] sm:$0xff]
        %vm790 = vcmask 261120
        %v791 = vsel %vm790, %v788, 0.0
        %792 = vadd.xlane.f32.xlu0 %v791
        %v793 = vpop.xlane.xlu0 %792
        %v794 = vrcp.pop 32.0
        %v795 = vmul.f32 %v793, %v794
        %v796 = vsub.f32 %v788, %v795
        %v797 = vmul.f32 %v796, %v796
        %v798 = vsel %vm790, %v797, 0.0
        %799 = vadd.xlane.f32.xlu0 %v798
        %v800 = vpop.xlane.xlu0 %799
        %v801 = vmul.f32 %v800, %v794
        %v802 = vadd.f32 %v801, 1e-06
        %v803 = vrsqrt.pop %v802
        %v804 = vmul.f32 %v796, %v803
        %v805 = vld [vmem:[#allocation13] sm:$0x1]
        %v807 = vlaneseq
        %v808 = vshrl.u32 %v807, 7
        %v809 = vsub.s32 0, %v808
        %v810 = vrot.slane %v805, %v809
        %v812 = vmul.f32 %v804, %v810
        %v813 = vld [vmem:[#allocation14] sm:$0x1]
        %v815 = vlaneseq
        %v816 = vshrl.u32 %v815, 7
        %v817 = vsub.s32 0, %v816
        %v818 = vrot.slane %v813, %v817
        %v820 = vadd.f32 %v812, %v818
        %v821 = vpack.c.bf16 %v820, %v820
        %v822 = vpack.c.bf16 %v789, %v789
        %v823 = vld [vmem:[%s3] sm:$0xf]
        %v824 = vld [vmem:[%s3 + $0x4] sm:$0xf]
        %v825 = vld [vmem:[%s3 + $0x8] sm:$0xf]
        %v826 = vld [vmem:[%s3 + $0xc] sm:$0xf]
        %v827 = vld [vmem:[%s4] sm:$0x1]
        %v829 = vlaneseq
        %v830 = vshrl.u32 %v829, 7
        %v831 = vsub.s32 0, %v830
        %v832 = vrot.slane %v827, %v831
        %v838 = vunpack.c.l.b16 %v823
        %v839 = vunpack.c.l.b16 %v824
        %v840 = vunpack.c.l.b16 %v825
        %v841 = vunpack.c.l.b16 %v826
        %v842 = vpack.c.b16 %v839, %v838
        %v843 = vpack.c.b16 %v841, %v840
        %v847 = vsel %vm790, %v821, 0
        %849 = vmatprep.subr.bf16.mxu0 0
        %850 = vmatpush1.bf16.msra.mxu0 %v842
        %851 = vmatprep.subr.bf16.mxu0 0
        %852 = vmatpush1.bf16.msra.mxu0 %v843
        %853 = vmatprep.subr.bf16.mxu0 0
        %854 = vmatpush1.bf16.msra.mxu0 0
        %855 = vmatprep.subr.bf16.mxu0 0
        %856 = vmatpush1.bf16.msra.mxu0 0
        %857 = vmatprep.subr.bf16.mxu0 0
        %858 = vmatpush1.bf16.msra.mxu0 0
        %859 = vmatprep.subr.bf16.mxu0 0
        %860 = vmatpush1.bf16.msra.mxu0 0
        %861 = vmatprep.subr.bf16.mxu0 0
        %862 = vmatpush1.bf16.msra.mxu0 0
        %863 = vmatprep.subr.bf16.mxu0 0
        %864 = vmatpush1.bf16.msra.mxu0 0
        %865 = vmatprep.subr.bf16.mxu0 0
        %866 = vmatpush1.bf16.msra.mxu0 0
        %867 = vmatprep.subr.bf16.mxu0 0
        %868 = vmatpush1.bf16.msra.mxu0 0
        %869 = vmatprep.subr.bf16.mxu0 0
        %870 = vmatpush1.bf16.msra.mxu0 0
        %871 = vmatprep.subr.bf16.mxu0 0
        %872 = vmatpush1.bf16.msra.mxu0 0
        %873 = vmatprep.subr.bf16.mxu0 0
        %874 = vmatpush1.bf16.msra.mxu0 0
        %875 = vmatprep.subr.bf16.mxu0 0
        %876 = vmatpush1.bf16.msra.mxu0 0
        %877 = vmatprep.subr.bf16.mxu0 0
        %878 = vmatpush1.bf16.msra.mxu0 0
        %879 = vmatprep.subr.bf16.mxu0 0
        %880 = vmatpush1.bf16.msra.mxu0 0
        %881 = vmatprep.mubr.bf16.mxu0 0
        %882 = vmatmul.mubr.bf16.gmra.mrb[0].mxu0 %v847
        %v883 = vpop.f32.mrb[0].mxu0
        %v884 = vadd.f32 %v832, %v883
        %v885 = vpop.f32.mrb[0].mxu0
        %v886 = vpop.f32.mrb[0].mxu0
        %v887 = vpop.f32.mrb[0].mxu0
        %888 = vdwg.mxu0
        %v889 = vld [vmem:[#allocation5] sm:$0xf]
        %v890 = vld [vmem:[#allocation5 + $0x4] sm:$0xf]
        %v891 = vld [vmem:[#allocation5 + $0x8] sm:$0xf]
        %v892 = vld [vmem:[#allocation5 + $0xc] sm:$0xf]
        %v893 = vld [vmem:[#allocation7] sm:$0x1]
        %v895 = vlaneseq
        %v896 = vshrl.u32 %v895, 7
        %v897 = vsub.s32 0, %v896
        %v898 = vrot.slane %v893, %v897
        %v904 = vunpack.c.l.b16 %v889
        %v905 = vunpack.c.l.b16 %v890
        %v906 = vunpack.c.l.b16 %v891
        %v907 = vunpack.c.l.b16 %v892
        %v908 = vpack.c.b16 %v905, %v904
        %v909 = vpack.c.b16 %v907, %v906
        %v913 = vsel %vm790, %v822, 0
        %915 = vmatprep.subr.bf16.mxu0 0
        %916 = vmatpush1.bf16.msra.mxu0 %v908
        %917 = vmatprep.subr.bf16.mxu0 0
        %918 = vmatpush1.bf16.msra.mxu0 %v909
        %919 = vmatprep.subr.bf16.mxu0 0
        %920 = vmatpush1.bf16.msra.mxu0 0
        %921 = vmatprep.subr.bf16.mxu0 0
        %922 = vmatpush1.bf16.msra.mxu0 0
        %923 = vmatprep.subr.bf16.mxu0 0
        %924 = vmatpush1.bf16.msra.mxu0 0
        %925 = vmatprep.subr.bf16.mxu0 0
        %926 = vmatpush1.bf16.msra.mxu0 0
        %927 = vmatprep.subr.bf16.mxu0 0
        %928 = vmatpush1.bf16.msra.mxu0 0
        %929 = vmatprep.subr.bf16.mxu0 0
        %930 = vmatpush1.bf16.msra.mxu0 0
        %931 = vmatprep.subr.bf16.mxu0 0
        %932 = vmatpush1.bf16.msra.mxu0 0
        %933 = vmatprep.subr.bf16.mxu0 0
        %934 = vmatpush1.bf16.msra.mxu0 0
        %935 = vmatprep.subr.bf16.mxu0 0
        %936 = vmatpush1.bf16.msra.mxu0 0
        %937 = vmatprep.subr.bf16.mxu0 0
        %938 = vmatpush1.bf16.msra.mxu0 0
        %939 = vmatprep.subr.bf16.mxu0 0
        %940 = vmatpush1.bf16.msra.mxu0 0
        %941 = vmatprep.subr.bf16.mxu0 0
        %942 = vmatpush1.bf16.msra.mxu0 0
        %943 = vmatprep.subr.bf16.mxu0 0
        %944 = vmatpush1.bf16.msra.mxu0 0
        %945 = vmatprep.subr.bf16.mxu0 0
        %946 = vmatpush1.bf16.msra.mxu0 0
        %947 = vmatprep.mubr.bf16.mxu0 0
        %948 = vmatmul.mubr.bf16.gmra.mrb[0].mxu0 %v913
        %v949 = vpop.f32.mrb[0].mxu0
        %v950 = vadd.f32 %v898, %v949
        %v951 = vpop.f32.mrb[0].mxu0
        %v952 = vpop.f32.mrb[0].mxu0
        %v953 = vpop.f32.mrb[0].mxu0
        %954 = vdwg.mxu0
        %v955 = vld [vmem:[#allocation8] sm:$0xf]
        %v956 = vld [vmem:[#allocation8 + $0x4] sm:$0xf]
        %v957 = vld [vmem:[#allocation8 + $0x8] sm:$0xf]
        %v958 = vld [vmem:[#allocation8 + $0xc] sm:$0xf]
        %v959 = vld [vmem:[#allocation10] sm:$0x1]
        %v961 = vlaneseq
        %v962 = vshrl.u32 %v961, 7
        %v963 = vsub.s32 0, %v962
        %v964 = vrot.slane %v959, %v963
        %v970 = vunpack.c.l.b16 %v955
        %v971 = vunpack.c.l.b16 %v956
        %v972 = vunpack.c.l.b16 %v957
        %v973 = vunpack.c.l.b16 %v958
        %v974 = vpack.c.b16 %v971, %v970
        %v975 = vpack.c.b16 %v973, %v972
        %978 = vmatprep.subr.bf16.mxu0 0
        %979 = vmatpush1.bf16.msra.mxu0 %v974
        %980 = vmatprep.subr.bf16.mxu0 0
        %981 = vmatpush1.bf16.msra.mxu0 %v975
        %982 = vmatprep.subr.bf16.mxu0 0
        %983 = vmatpush1.bf16.msra.mxu0 0
        %984 = vmatprep.subr.bf16.mxu0 0
        %985 = vmatpush1.bf16.msra.mxu0 0
        %986 = vmatprep.subr.bf16.mxu0 0
        %987 = vmatpush1.bf16.msra.mxu0 0
        %988 = vmatprep.subr.bf16.mxu0 0
        %989 = vmatpush1.bf16.msra.mxu0 0
        %990 = vmatprep.subr.bf16.mxu0 0
        %991 = vmatpush1.bf16.msra.mxu0 0
        %992 = vmatprep.subr.bf16.mxu0 0
        %993 = vmatpush1.bf16.msra.mxu0 0
        %994 = vmatprep.subr.bf16.mxu0 0
        %995 = vmatpush1.bf16.msra.mxu0 0
        %996 = vmatprep.subr.bf16.mxu0 0
        %997 = vmatpush1.bf16.msra.mxu0 0
        %998 = vmatprep.subr.bf16.mxu0 0
        %999 = vmatpush1.bf16.msra.mxu0 0
        %1000 = vmatprep.subr.bf16.mxu0 0
        %1001 = vmatpush1.bf16.msra.mxu0 0
        %1002 = vmatprep.subr.bf16.mxu0 0
        %1003 = vmatpush1.bf16.msra.mxu0 0
        %1004 = vmatprep.subr.bf16.mxu0 0
        %1005 = vmatpush1.bf16.msra.mxu0 0
        %1006 = vmatprep.subr.bf16.mxu0 0
        %1007 = vmatpush1.bf16.msra.mxu0 0
        %1008 = vmatprep.subr.bf16.mxu0 0
        %1009 = vmatpush1.bf16.msra.mxu0 0
        %1010 = vmatprep.mubr.bf16.mxu0 0
        %1011 = vmatmul.mubr.bf16.gmra.mrb[0].mxu0 %v913
        %v1012 = vpop.f32.mrb[0].mxu0
        %v1013 = vadd.f32 %v964, %v1012
        %v1014 = vpop.f32.mrb[0].mxu0
        %v1015 = vpop.f32.mrb[0].mxu0
        %v1016 = vpop.f32.mrb[0].mxu0
        %1017 = vdwg.mxu0
        %v1018 = vpack.c.bf16 %v884, %v884
        %1020 = vrot.lane.b32.xlu0 %v1018, 120
        %v1021 = vpop.permute.xlu0 %1020
        %1022 = vrot.lane.b32.xlu0 %v1018, 112
        %v1023 = vpop.permute.xlu0 %1022
        %1024 = vrot.lane.b32.xlu0 %v1018, 104
        %v1025 = vpop.permute.xlu0 %1024
        %v1027 = vunpack.c.l.s4 1983009808
        %v1028 = vunpack.c.0.s8 %v1027
        %v1029 = vlaneseq
        %v1030 = vshrl.u32 %v1029, 7
        %v1031 = vsub.s32 %v1028, %v1030
        %v1032 = vrot.slane %v1018, %v1031
        %v1035 = vunpack.c.l.s4 1983009808
        %v1036 = vunpack.c.0.s8 %v1035
        %v1037 = vlaneseq
        %v1038 = vshrl.u32 %v1037, 7
        %v1039 = vsub.s32 %v1036, %v1038
        %v1040 = vrot.slane %v1023, %v1039
        %v1041 = vcombine.low %v1032, %v1040
        %v1042 = vcombine.high %v1032, %v1040
        %v1044 = vunpack.c.l.s4 1934713408
        %v1045 = vunpack.c.0.s8 %v1044
        %v1046 = vlaneseq
        %v1047 = vshrl.u32 %v1046, 7
        %v1048 = vsub.s32 %v1045, %v1047
        %v1049 = vrot.slane %v1041, %v1048
        %v1051 = vunpack.c.l.s4 1934713408
        %v1052 = vunpack.c.0.s8 %v1051
        %v1053 = vlaneseq
        %v1054 = vshrl.u32 %v1053, 7
        %v1055 = vsub.s32 %v1052, %v1054
        %v1056 = vrot.slane %v1042, %v1055
        %v1057 = vcombine.high %v1049, 0
        %v1058 = vcombine.high %v1056, 0
        %v1061 = vunpack.c.l.s4 1983009808
        %v1062 = vunpack.c.0.s8 %v1061
        %v1063 = vlaneseq
        %v1064 = vshrl.u32 %v1063, 7
        %v1065 = vsub.s32 %v1062, %v1064
        %v1066 = vrot.slane %v1021, %v1065
        %v1069 = vunpack.c.l.s4 1983009808
        %v1070 = vunpack.c.0.s8 %v1069
        %v1071 = vlaneseq
        %v1072 = vshrl.u32 %v1071, 7
        %v1073 = vsub.s32 %v1070, %v1072
        %v1074 = vrot.slane %v1025, %v1073
        %v1075 = vcombine.low %v1066, %v1074
        %v1076 = vcombine.high %v1066, %v1074
        %v1078 = vunpack.c.l.s4 1934713408
        %v1079 = vunpack.c.0.s8 %v1078
        %v1080 = vlaneseq
        %v1081 = vshrl.u32 %v1080, 7
        %v1082 = vsub.s32 %v1079, %v1081
        %v1083 = vrot.slane %v1075, %v1082
        %v1085 = vunpack.c.l.s4 1934713408
        %v1086 = vunpack.c.0.s8 %v1085
        %v1087 = vlaneseq
        %v1088 = vshrl.u32 %v1087, 7
        %v1089 = vsub.s32 %v1086, %v1088
        %v1090 = vrot.slane %v1076, %v1089
        %v1091 = vcombine.high %v1083, 0
        %v1092 = vcombine.high %v1090, 0
        %v1095 = vpack.i.b16 %v1083, %v1049
        %v1097 = vshrl.u32 %v1049, 16
        %v1098 = vshrl.u32 %v1083, 16
        %v1099 = vpack.i.b16 %v1098, %v1097
        %v1103 = vpack.i.b16 %v1091, %v1057
        %v1105 = vshrl.u32 %v1057, 16
        %v1106 = vshrl.u32 %v1091, 16
        %v1107 = vpack.i.b16 %v1106, %v1105
        %v1111 = vpack.i.b16 %v1090, %v1056
        %v1113 = vshrl.u32 %v1056, 16
        %v1114 = vshrl.u32 %v1090, 16
        %v1115 = vpack.i.b16 %v1114, %v1113
        %v1119 = vpack.i.b16 %v1092, %v1058
        %v1121 = vshrl.u32 %v1058, 16
        %v1122 = vshrl.u32 %v1092, 16
        %v1123 = vpack.i.b16 %v1122, %v1121
        %v1125 = vcombine.low %v1095, %v1111
        %v1127 = vunpack.c.l.s4 1983009808
        %v1128 = vunpack.c.0.s8 %v1127
        %v1129 = vlaneseq
        %v1130 = vshrl.u32 %v1129, 7
        %v1131 = vsub.s32 %v1128, %v1130
        %v1132 = vrot.slane %v1125, %v1131
        %v1133 = vcombine.low %v1103, %v1119
        %v1135 = vunpack.c.l.s4 1983009808
        %v1136 = vunpack.c.0.s8 %v1135
        %v1137 = vlaneseq
        %v1138 = vshrl.u32 %v1137, 7
        %v1139 = vsub.s32 %v1136, %v1138
        %v1140 = vrot.slane %v1133, %v1139
        %v1141 = vcombine.low %v1132, %v1140
        %v1143 = vunpack.c.l.s4 1934713408
        %v1144 = vunpack.c.0.s8 %v1143
        %v1145 = vlaneseq
        %v1146 = vshrl.u32 %v1145, 7
        %v1147 = vsub.s32 %v1144, %v1146
        %v1148 = vrot.slane %v1141, %v1147
        %v1149 = vcombine.high %v1148, 0
        %v1150 = vcombine.low %v1099, %v1115
        %v1152 = vunpack.c.l.s4 1983009808
        %v1153 = vunpack.c.0.s8 %v1152
        %v1154 = vlaneseq
        %v1155 = vshrl.u32 %v1154, 7
        %v1156 = vsub.s32 %v1153, %v1155
        %v1157 = vrot.slane %v1150, %v1156
        %v1158 = vcombine.low %v1107, %v1123
        %v1160 = vunpack.c.l.s4 1983009808
        %v1161 = vunpack.c.0.s8 %v1160
        %v1162 = vlaneseq
        %v1163 = vshrl.u32 %v1162, 7
        %v1164 = vsub.s32 %v1161, %v1163
        %v1165 = vrot.slane %v1158, %v1164
        %v1166 = vcombine.low %v1157, %v1165
        %v1168 = vunpack.c.l.s4 1934713408
        %v1169 = vunpack.c.0.s8 %v1168
        %v1170 = vlaneseq
        %v1171 = vshrl.u32 %v1170, 7
        %v1172 = vsub.s32 %v1169, %v1171
        %v1173 = vrot.slane %v1166, %v1172
        %v1174 = vcombine.high %v1173, 0
        %v1177 = vpack.i.b16 %v1173, %v1148
        %v1178 = vshrl.u32 %v1148, 16
        %v1179 = vshrl.u32 %v1173, 16
        %v1180 = vpack.i.b16 %v1179, %v1178
        %v1183 = vpack.i.b16 %v1174, %v1149
        %v1184 = vshrl.u32 %v1149, 16
        %v1185 = vshrl.u32 %v1174, 16
        %v1186 = vpack.i.b16 %v1185, %v1184
        %v1187 = vpack.c.bf16 %v950, %v950
        %1189 = vrot.lane.b32.xlu0 %v1187, 120
        %v1190 = vpop.permute.xlu0 %1189
        %1191 = vrot.lane.b32.xlu0 %v1187, 112
        %v1192 = vpop.permute.xlu0 %1191
        %1193 = vrot.lane.b32.xlu0 %v1187, 104
        %v1194 = vpop.permute.xlu0 %1193
        %v1196 = vunpack.c.l.s4 1983009808
        %v1197 = vunpack.c.0.s8 %v1196
        %v1198 = vlaneseq
        %v1199 = vshrl.u32 %v1198, 7
        %v1200 = vsub.s32 %v1197, %v1199
        %v1201 = vrot.slane %v1187, %v1200
        %v1204 = vunpack.c.l.s4 1983009808
        %v1205 = vunpack.c.0.s8 %v1204
        %v1206 = vlaneseq
        %v1207 = vshrl.u32 %v1206, 7
        %v1208 = vsub.s32 %v1205, %v1207
        %v1209 = vrot.slane %v1192, %v1208
        %v1210 = vcombine.low %v1201, %v1209
        %v1211 = vcombine.high %v1201, %v1209
        %v1213 = vunpack.c.l.s4 1934713408
        %v1214 = vunpack.c.0.s8 %v1213
        %v1215 = vlaneseq
        %v1216 = vshrl.u32 %v1215, 7
        %v1217 = vsub.s32 %v1214, %v1216
        %v1218 = vrot.slane %v1210, %v1217
        %v1220 = vunpack.c.l.s4 1934713408
        %v1221 = vunpack.c.0.s8 %v1220
        %v1222 = vlaneseq
        %v1223 = vshrl.u32 %v1222, 7
        %v1224 = vsub.s32 %v1221, %v1223
        %v1225 = vrot.slane %v1211, %v1224
        %v1226 = vcombine.high %v1218, 0
        %v1227 = vcombine.high %v1225, 0
        %v1230 = vunpack.c.l.s4 1983009808
        %v1231 = vunpack.c.0.s8 %v1230
        %v1232 = vlaneseq
        %v1233 = vshrl.u32 %v1232, 7
        %v1234 = vsub.s32 %v1231, %v1233
        %v1235 = vrot.slane %v1190, %v1234
        %v1238 = vunpack.c.l.s4 1983009808
        %v1239 = vunpack.c.0.s8 %v1238
        %v1240 = vlaneseq
        %v1241 = vshrl.u32 %v1240, 7
        %v1242 = vsub.s32 %v1239, %v1241
        %v1243 = vrot.slane %v1194, %v1242
        %v1244 = vcombine.low %v1235, %v1243
        %v1245 = vcombine.high %v1235, %v1243
        %v1247 = vunpack.c.l.s4 1934713408
        %v1248 = vunpack.c.0.s8 %v1247
        %v1249 = vlaneseq
        %v1250 = vshrl.u32 %v1249, 7
        %v1251 = vsub.s32 %v1248, %v1250
        %v1252 = vrot.slane %v1244, %v1251
        %v1254 = vunpack.c.l.s4 1934713408
        %v1255 = vunpack.c.0.s8 %v1254
        %v1256 = vlaneseq
        %v1257 = vshrl.u32 %v1256, 7
        %v1258 = vsub.s32 %v1255, %v1257
        %v1259 = vrot.slane %v1245, %v1258
        %v1260 = vcombine.high %v1252, 0
        %v1261 = vcombine.high %v1259, 0
        %v1264 = vpack.i.b16 %v1252, %v1218
        %v1266 = vshrl.u32 %v1218, 16
        %v1267 = vshrl.u32 %v1252, 16
        %v1268 = vpack.i.b16 %v1267, %v1266
        %v1272 = vpack.i.b16 %v1260, %v1226
        %v1274 = vshrl.u32 %v1226, 16
        %v1275 = vshrl.u32 %v1260, 16
        %v1276 = vpack.i.b16 %v1275, %v1274
        %v1280 = vpack.i.b16 %v1259, %v1225
        %v1282 = vshrl.u32 %v1225, 16
        %v1283 = vshrl.u32 %v1259, 16
        %v1284 = vpack.i.b16 %v1283, %v1282
        %v1288 = vpack.i.b16 %v1261, %v1227
        %v1290 = vshrl.u32 %v1227, 16
        %v1291 = vshrl.u32 %v1261, 16
        %v1292 = vpack.i.b16 %v1291, %v1290
        %v1294 = vcombine.low %v1264, %v1280
        %v1296 = vunpack.c.l.s4 1983009808
        %v1297 = vunpack.c.0.s8 %v1296
        %v1298 = vlaneseq
        %v1299 = vshrl.u32 %v1298, 7
        %v1300 = vsub.s32 %v1297, %v1299
        %v1301 = vrot.slane %v1294, %v1300
        %v1302 = vcombine.low %v1272, %v1288
        %v1304 = vunpack.c.l.s4 1983009808
        %v1305 = vunpack.c.0.s8 %v1304
        %v1306 = vlaneseq
        %v1307 = vshrl.u32 %v1306, 7
        %v1308 = vsub.s32 %v1305, %v1307
        %v1309 = vrot.slane %v1302, %v1308
        %v1310 = vcombine.low %v1301, %v1309
        %v1312 = vunpack.c.l.s4 1934713408
        %v1313 = vunpack.c.0.s8 %v1312
        %v1314 = vlaneseq
        %v1315 = vshrl.u32 %v1314, 7
        %v1316 = vsub.s32 %v1313, %v1315
        %v1317 = vrot.slane %v1310, %v1316
        %v1318 = vcombine.high %v1317, 0
        %v1319 = vcombine.low %v1268, %v1284
        %v1321 = vunpack.c.l.s4 1983009808
        %v1322 = vunpack.c.0.s8 %v1321
        %v1323 = vlaneseq
        %v1324 = vshrl.u32 %v1323, 7
        %v1325 = vsub.s32 %v1322, %v1324
        %v1326 = vrot.slane %v1319, %v1325
        %v1327 = vcombine.low %v1276, %v1292
        %v1329 = vunpack.c.l.s4 1983009808
        %v1330 = vunpack.c.0.s8 %v1329
        %v1331 = vlaneseq
        %v1332 = vshrl.u32 %v1331, 7
        %v1333 = vsub.s32 %v1330, %v1332
        %v1334 = vrot.slane %v1327, %v1333
        %v1335 = vcombine.low %v1326, %v1334
        %v1337 = vunpack.c.l.s4 1934713408
        %v1338 = vunpack.c.0.s8 %v1337
        %v1339 = vlaneseq
        %v1340 = vshrl.u32 %v1339, 7
        %v1341 = vsub.s32 %v1338, %v1340
        %v1342 = vrot.slane %v1335, %v1341
        %v1343 = vcombine.high %v1342, 0
        %v1346 = vpack.i.b16 %v1342, %v1317
        %v1347 = vshrl.u32 %v1317, 16
        %v1348 = vshrl.u32 %v1342, 16
        %v1349 = vpack.i.b16 %v1348, %v1347
        %v1352 = vpack.i.b16 %v1343, %v1318
        %v1353 = vshrl.u32 %v1318, 16
        %v1354 = vshrl.u32 %v1343, 16
        %v1355 = vpack.i.b16 %v1354, %v1353
        %v1356 = vpack.c.bf16 %v1013, %v1013
        %1358 = vrot.lane.b32.xlu0 %v1356, 120
        %v1359 = vpop.permute.xlu0 %1358
        %1360 = vrot.lane.b32.xlu0 %v1356, 112
        %v1361 = vpop.permute.xlu0 %1360
        %1362 = vrot.lane.b32.xlu0 %v1356, 104
        %v1363 = vpop.permute.xlu0 %1362
        %v1365 = vunpack.c.l.s4 1983009808
        %v1366 = vunpack.c.0.s8 %v1365
        %v1367 = vlaneseq
        %v1368 = vshrl.u32 %v1367, 7
        %v1369 = vsub.s32 %v1366, %v1368
        %v1370 = vrot.slane %v1356, %v1369
        %v1373 = vunpack.c.l.s4 1983009808
        %v1374 = vunpack.c.0.s8 %v1373
        %v1375 = vlaneseq
        %v1376 = vshrl.u32 %v1375, 7
        %v1377 = vsub.s32 %v1374, %v1376
        %v1378 = vrot.slane %v1361, %v1377
        %v1379 = vcombine.low %v1370, %v1378
        %v1380 = vcombine.high %v1370, %v1378
        %v1382 = vunpack.c.l.s4 1934713408
        %v1383 = vunpack.c.0.s8 %v1382
        %v1384 = vlaneseq
        %v1385 = vshrl.u32 %v1384, 7
        %v1386 = vsub.s32 %v1383, %v1385
        %v1387 = vrot.slane %v1379, %v1386
        %v1389 = vunpack.c.l.s4 1934713408
        %v1390 = vunpack.c.0.s8 %v1389
        %v1391 = vlaneseq
        %v1392 = vshrl.u32 %v1391, 7
        %v1393 = vsub.s32 %v1390, %v1392
        %v1394 = vrot.slane %v1380, %v1393
        %v1395 = vcombine.high %v1387, 0
        %v1396 = vcombine.high %v1394, 0
        %v1399 = vunpack.c.l.s4 1983009808
        %v1400 = vunpack.c.0.s8 %v1399
        %v1401 = vlaneseq
        %v1402 = vshrl.u32 %v1401, 7
        %v1403 = vsub.s32 %v1400, %v1402
        %v1404 = vrot.slane %v1359, %v1403
        %v1407 = vunpack.c.l.s4 1983009808
        %v1408 = vunpack.c.0.s8 %v1407
        %v1409 = vlaneseq
        %v1410 = vshrl.u32 %v1409, 7
        %v1411 = vsub.s32 %v1408, %v1410
        %v1412 = vrot.slane %v1363, %v1411
        %v1413 = vcombine.low %v1404, %v1412
        %v1414 = vcombine.high %v1404, %v1412
        %v1416 = vunpack.c.l.s4 1934713408
        %v1417 = vunpack.c.0.s8 %v1416
        %v1418 = vlaneseq
        %v1419 = vshrl.u32 %v1418, 7
        %v1420 = vsub.s32 %v1417, %v1419
        %v1421 = vrot.slane %v1413, %v1420
        %v1423 = vunpack.c.l.s4 1934713408
        %v1424 = vunpack.c.0.s8 %v1423
        %v1425 = vlaneseq
        %v1426 = vshrl.u32 %v1425, 7
        %v1427 = vsub.s32 %v1424, %v1426
        %v1428 = vrot.slane %v1414, %v1427
        %v1429 = vcombine.high %v1421, 0
        %v1430 = vcombine.high %v1428, 0
        %v1433 = vpack.i.b16 %v1421, %v1387
        %v1435 = vshrl.u32 %v1387, 16
        %v1436 = vshrl.u32 %v1421, 16
        %v1437 = vpack.i.b16 %v1436, %v1435
        %v1441 = vpack.i.b16 %v1429, %v1395
        %v1443 = vshrl.u32 %v1395, 16
        %v1444 = vshrl.u32 %v1429, 16
        %v1445 = vpack.i.b16 %v1444, %v1443
        %v1449 = vpack.i.b16 %v1428, %v1394
        %v1451 = vshrl.u32 %v1394, 16
        %v1452 = vshrl.u32 %v1428, 16
        %v1453 = vpack.i.b16 %v1452, %v1451
        %v1457 = vpack.i.b16 %v1430, %v1396
        %v1459 = vshrl.u32 %v1396, 16
        %v1460 = vshrl.u32 %v1430, 16
        %v1461 = vpack.i.b16 %v1460, %v1459
        %v1463 = vcombine.low %v1433, %v1449
        %v1465 = vunpack.c.l.s4 1983009808
        %v1466 = vunpack.c.0.s8 %v1465
        %v1467 = vlaneseq
        %v1468 = vshrl.u32 %v1467, 7
        %v1469 = vsub.s32 %v1466, %v1468
        %v1470 = vrot.slane %v1463, %v1469
        %v1471 = vcombine.low %v1441, %v1457
        %v1473 = vunpack.c.l.s4 1983009808
        %v1474 = vunpack.c.0.s8 %v1473
        %v1475 = vlaneseq
        %v1476 = vshrl.u32 %v1475, 7
        %v1477 = vsub.s32 %v1474, %v1476
        %v1478 = vrot.slane %v1471, %v1477
        %v1479 = vcombine.low %v1470, %v1478
        %v1481 = vunpack.c.l.s4 1934713408
        %v1482 = vunpack.c.0.s8 %v1481
        %v1483 = vlaneseq
        %v1484 = vshrl.u32 %v1483, 7
        %v1485 = vsub.s32 %v1482, %v1484
        %v1486 = vrot.slane %v1479, %v1485
        %v1487 = vcombine.high %v1486, 0
        %v1488 = vcombine.low %v1437, %v1453
        %v1490 = vunpack.c.l.s4 1983009808
        %v1491 = vunpack.c.0.s8 %v1490
        %v1492 = vlaneseq
        %v1493 = vshrl.u32 %v1492, 7
        %v1494 = vsub.s32 %v1491, %v1493
        %v1495 = vrot.slane %v1488, %v1494
        %v1496 = vcombine.low %v1445, %v1461
        %v1498 = vunpack.c.l.s4 1983009808
        %v1499 = vunpack.c.0.s8 %v1498
        %v1500 = vlaneseq
        %v1501 = vshrl.u32 %v1500, 7
        %v1502 = vsub.s32 %v1499, %v1501
        %v1503 = vrot.slane %v1496, %v1502
        %v1504 = vcombine.low %v1495, %v1503
        %v1506 = vunpack.c.l.s4 1934713408
        %v1507 = vunpack.c.0.s8 %v1506
        %v1508 = vlaneseq
        %v1509 = vshrl.u32 %v1508, 7
        %v1510 = vsub.s32 %v1507, %v1509
        %v1511 = vrot.slane %v1504, %v1510
        %v1512 = vcombine.high %v1511, 0
        %v1515 = vpack.i.b16 %v1511, %v1486
        %v1516 = vshrl.u32 %v1486, 16
        %v1517 = vshrl.u32 %v1511, 16
        %v1518 = vpack.i.b16 %v1517, %v1516
        %v1521 = vpack.i.b16 %v1512, %v1487
        %v1522 = vshrl.u32 %v1487, 16
        %v1523 = vshrl.u32 %v1512, 16
        %v1524 = vpack.i.b16 %v1523, %v1522
        %vm1525 = vcmask 64512
        %v1527 = vsel %vm1525, %v1177, 0
        %v1530 = vsel %vm1525, %v1346, 0
        %1532 = vmatprep.subr.bf16.mxu0 0
        %1533 = vmatpush1.bf16.xpose.msra.mxu0 %v1530
        %1534 = vmatprep.subr.bf16.mxu0 0
        %1535 = vmatpush1.bf16.xpose.msra.mxu0 0
        %1536 = vmatprep.subr.bf16.mxu0 0
        %1537 = vmatpush1.bf16.xpose.msra.mxu0 0
        %1538 = vmatprep.subr.bf16.mxu0 0
        %1539 = vmatpush1.bf16.xpose.msra.mxu0 0
        %1540 = vmatprep.subr.bf16.mxu0 0
        %1541 = vmatpush1.bf16.xpose.msra.mxu0 0
        %1542 = vmatprep.subr.bf16.mxu0 0
        %1543 = vmatpush1.bf16.xpose.msra.mxu0 0
        %1544 = vmatprep.subr.bf16.mxu0 0
        %1545 = vmatpush1.bf16.xpose.msra.mxu0 0
        %1546 = vmatprep.subr.bf16.mxu0 0
        %1547 = vmatpush1.bf16.xpose.msra.mxu0 0
        %1548 = vmatprep.subr.bf16.mxu0 0
        %1549 = vmatpush1.bf16.xpose.msra.mxu0 0
        %1550 = vmatprep.subr.bf16.mxu0 0
        %1551 = vmatpush1.bf16.xpose.msra.mxu0 0
        %1552 = vmatprep.subr.bf16.mxu0 0
        %1553 = vmatpush1.bf16.xpose.msra.mxu0 0
        %1554 = vmatprep.subr.bf16.mxu0 0
        %1555 = vmatpush1.bf16.xpose.msra.mxu0 0
        %1556 = vmatprep.subr.bf16.mxu0 0
        %1557 = vmatpush1.bf16.xpose.msra.mxu0 0
        %1558 = vmatprep.subr.bf16.mxu0 0
        %1559 = vmatpush1.bf16.xpose.msra.mxu0 0
        %1560 = vmatprep.subr.bf16.mxu0 0
        %1561 = vmatpush1.bf16.xpose.msra.mxu0 0
        %1562 = vmatprep.subr.bf16.mxu0 0
        %1563 = vmatpush1.bf16.xpose.msra.mxu0 0
        %1564 = vmatprep.mubr.bf16.mxu0 0
        %1565 = vmatmul.mubr.bf16.gmra.mrb[0].mxu0 %v1527
        %v1566 = vpop.f32.mrb[0].mxu0
        %v1567 = vadd.f32 0.0, %v1566
        %v1568 = vpop.f32.mrb[0].mxu0
        %v1569 = vpop.f32.mrb[0].mxu0
        %v1570 = vpop.f32.mrb[0].mxu0
        %1571 = vdwg.mxu0
        %v1573 = vsel %vm1525, %v1180, 0
        %v1576 = vsel %vm1525, %v1349, 0
        %1578 = vmatprep.subr.bf16.mxu0 0
        %1579 = vmatpush1.bf16.xpose.msra.mxu0 %v1576
        %1580 = vmatprep.subr.bf16.mxu0 0
        %1581 = vmatpush1.bf16.xpose.msra.mxu0 0
        %1582 = vmatprep.subr.bf16.mxu0 0
        %1583 = vmatpush1.bf16.xpose.msra.mxu0 0
        %1584 = vmatprep.subr.bf16.mxu0 0
        %1585 = vmatpush1.bf16.xpose.msra.mxu0 0
        %1586 = vmatprep.subr.bf16.mxu0 0
        %1587 = vmatpush1.bf16.xpose.msra.mxu0 0
        %1588 = vmatprep.subr.bf16.mxu0 0
        %1589 = vmatpush1.bf16.xpose.msra.mxu0 0
        %1590 = vmatprep.subr.bf16.mxu0 0
        %1591 = vmatpush1.bf16.xpose.msra.mxu0 0
        %1592 = vmatprep.subr.bf16.mxu0 0
        %1593 = vmatpush1.bf16.xpose.msra.mxu0 0
        %1594 = vmatprep.subr.bf16.mxu0 0
        %1595 = vmatpush1.bf16.xpose.msra.mxu0 0
        %1596 = vmatprep.subr.bf16.mxu0 0
        %1597 = vmatpush1.bf16.xpose.msra.mxu0 0
        %1598 = vmatprep.subr.bf16.mxu0 0
        %1599 = vmatpush1.bf16.xpose.msra.mxu0 0
        %1600 = vmatprep.subr.bf16.mxu0 0
        %1601 = vmatpush1.bf16.xpose.msra.mxu0 0
        %1602 = vmatprep.subr.bf16.mxu0 0
        %1603 = vmatpush1.bf16.xpose.msra.mxu0 0
        %1604 = vmatprep.subr.bf16.mxu0 0
        %1605 = vmatpush1.bf16.xpose.msra.mxu0 0
        %1606 = vmatprep.subr.bf16.mxu0 0
        %1607 = vmatpush1.bf16.xpose.msra.mxu0 0
        %1608 = vmatprep.subr.bf16.mxu0 0
        %1609 = vmatpush1.bf16.xpose.msra.mxu0 0
        %1610 = vmatprep.mubr.bf16.mxu0 0
        %1611 = vmatmul.mubr.bf16.gmra.mrb[0].mxu0 %v1573
        %v1612 = vpop.f32.mrb[0].mxu0
        %v1613 = vadd.f32 0.0, %v1612
        %v1614 = vpop.f32.mrb[0].mxu0
        %v1615 = vpop.f32.mrb[0].mxu0
        %v1616 = vpop.f32.mrb[0].mxu0
        %1617 = vdwg.mxu0
        %v1619 = vsel %vm1525, %v1183, 0
        %v1622 = vsel %vm1525, %v1352, 0
        %1624 = vmatprep.subr.bf16.mxu0 0
        %1625 = vmatpush1.bf16.xpose.msra.mxu0 %v1622
        %1626 = vmatprep.subr.bf16.mxu0 0
        %1627 = vmatpush1.bf16.xpose.msra.mxu0 0
        %1628 = vmatprep.subr.bf16.mxu0 0
        %1629 = vmatpush1.bf16.xpose.msra.mxu0 0
        %1630 = vmatprep.subr.bf16.mxu0 0
        %1631 = vmatpush1.bf16.xpose.msra.mxu0 0
        %1632 = vmatprep.subr.bf16.mxu0 0
        %1633 = vmatpush1.bf16.xpose.msra.mxu0 0
        %1634 = vmatprep.subr.bf16.mxu0 0
        %1635 = vmatpush1.bf16.xpose.msra.mxu0 0
        %1636 = vmatprep.subr.bf16.mxu0 0
        %1637 = vmatpush1.bf16.xpose.msra.mxu0 0
        %1638 = vmatprep.subr.bf16.mxu0 0
        %1639 = vmatpush1.bf16.xpose.msra.mxu0 0
        %1640 = vmatprep.subr.bf16.mxu0 0
        %1641 = vmatpush1.bf16.xpose.msra.mxu0 0
        %1642 = vmatprep.subr.bf16.mxu0 0
        %1643 = vmatpush1.bf16.xpose.msra.mxu0 0
        %1644 = vmatprep.subr.bf16.mxu0 0
        %1645 = vmatpush1.bf16.xpose.msra.mxu0 0
        %1646 = vmatprep.subr.bf16.mxu0 0
        %1647 = vmatpush1.bf16.xpose.msra.mxu0 0
        %1648 = vmatprep.subr.bf16.mxu0 0
        %1649 = vmatpush1.bf16.xpose.msra.mxu0 0
        %1650 = vmatprep.subr.bf16.mxu0 0
        %1651 = vmatpush1.bf16.xpose.msra.mxu0 0
        %1652 = vmatprep.subr.bf16.mxu0 0
        %1653 = vmatpush1.bf16.xpose.msra.mxu0 0
        %1654 = vmatprep.subr.bf16.mxu0 0
        %1655 = vmatpush1.bf16.xpose.msra.mxu0 0
        %1656 = vmatprep.mubr.bf16.mxu0 0
        %1657 = vmatmul.mubr.bf16.gmra.mrb[0].mxu0 %v1619
        %v1658 = vpop.f32.mrb[0].mxu0
        %v1659 = vadd.f32 0.0, %v1658
        %v1660 = vpop.f32.mrb[0].mxu0
        %v1661 = vpop.f32.mrb[0].mxu0
        %v1662 = vpop.f32.mrb[0].mxu0
        %1663 = vdwg.mxu0
        %v1665 = vsel %vm1525, %v1186, 0
        %v1668 = vsel %vm1525, %v1355, 0
        %1670 = vmatprep.subr.bf16.mxu0 0
        %1671 = vmatpush1.bf16.xpose.msra.mxu0 %v1668
        %1672 = vmatprep.subr.bf16.mxu0 0
        %1673 = vmatpush1.bf16.xpose.msra.mxu0 0
        %1674 = vmatprep.subr.bf16.mxu0 0
        %1675 = vmatpush1.bf16.xpose.msra.mxu0 0
        %1676 = vmatprep.subr.bf16.mxu0 0
        %1677 = vmatpush1.bf16.xpose.msra.mxu0 0
        %1678 = vmatprep.subr.bf16.mxu0 0
        %1679 = vmatpush1.bf16.xpose.msra.mxu0 0
        %1680 = vmatprep.subr.bf16.mxu0 0
        %1681 = vmatpush1.bf16.xpose.msra.mxu0 0
        %1682 = vmatprep.subr.bf16.mxu0 0
        %1683 = vmatpush1.bf16.xpose.msra.mxu0 0
        %1684 = vmatprep.subr.bf16.mxu0 0
        %1685 = vmatpush1.bf16.xpose.msra.mxu0 0
        %1686 = vmatprep.subr.bf16.mxu0 0
        %1687 = vmatpush1.bf16.xpose.msra.mxu0 0
        %1688 = vmatprep.subr.bf16.mxu0 0
        %1689 = vmatpush1.bf16.xpose.msra.mxu0 0
        %1690 = vmatprep.subr.bf16.mxu0 0
        %1691 = vmatpush1.bf16.xpose.msra.mxu0 0
        %1692 = vmatprep.subr.bf16.mxu0 0
        %1693 = vmatpush1.bf16.xpose.msra.mxu0 0
        %1694 = vmatprep.subr.bf16.mxu0 0
        %1695 = vmatpush1.bf16.xpose.msra.mxu0 0
        %1696 = vmatprep.subr.bf16.mxu0 0
        %1697 = vmatpush1.bf16.xpose.msra.mxu0 0
        %1698 = vmatprep.subr.bf16.mxu0 0
        %1699 = vmatpush1.bf16.xpose.msra.mxu0 0
        %1700 = vmatprep.subr.bf16.mxu0 0
        %1701 = vmatpush1.bf16.xpose.msra.mxu0 0
        %1702 = vmatprep.mubr.bf16.mxu0 0
        %1703 = vmatmul.mubr.bf16.gmra.mrb[0].mxu0 %v1665
        %v1704 = vpop.f32.mrb[0].mxu0
        %v1705 = vadd.f32 0.0, %v1704
        %v1706 = vpop.f32.mrb[0].mxu0
        %v1707 = vpop.f32.mrb[0].mxu0
        %v1708 = vpop.f32.mrb[0].mxu0
        %1709 = vdwg.mxu0
        %v1710 = vmul.f32 %v1567, 0.35355338
        %v1711 = vmul.f32 %v1613, 0.35355338
        %v1712 = vmul.f32 %v1659, 0.35355338
        %v1713 = vmul.f32 %v1705, 0.35355338
        %v1714 = vld [vmem:[%s678] sm:$0xff]
        %v1715 = vld [vmem:[%s678 + $0x8] sm:$0xff]
        %v1716 = vld [vmem:[%s678 + $0x10] sm:$0xff]
        %v1717 = vld [vmem:[%s678 + $0x18] sm:$0xff]
        %v1718 = vadd.f32 %v1710, %v1714
        %v1719 = vadd.f32 %v1711, %v1715
        %v1720 = vadd.f32 %v1712, %v1716
        %v1721 = vadd.f32 %v1713, %v1717
        %v1722 = vsel %vm1525, %v1718, -inf
        %1723 = vmax.xlane.f32.xlu0 %v1722
        %v1724 = vpop.xlane.xlu0 %1723
        %v1725 = vsel %vm1525, %v1719, -inf
        %1726 = vmax.xlane.f32.xlu0 %v1725
        %v1727 = vpop.xlane.xlu0 %1726
        %v1728 = vsel %vm1525, %v1720, -inf
        %1729 = vmax.xlane.f32.xlu0 %v1728
        %v1730 = vpop.xlane.xlu0 %1729
        %v1731 = vsel %vm1525, %v1721, -inf
        %1732 = vmax.xlane.f32.xlu0 %v1731
        %v1733 = vpop.xlane.xlu0 %1732
        %v1734 = vsub.f32 %v1718, %v1724
        %v1735 = vsub.f32 %v1719, %v1727
        %v1736 = vsub.f32 %v1720, %v1730
        %v1737 = vsub.f32 %v1721, %v1733
        %v1738 = vmul.f32 %v1734, 1.442695
        %v1739 = vpow.pop %v1738
        %v1740 = vmul.f32 %v1735, 1.442695
        %v1741 = vpow.pop %v1740
        %v1742 = vmul.f32 %v1736, 1.442695
        %v1743 = vpow.pop %v1742
        %v1744 = vmul.f32 %v1737, 1.442695
        %v1745 = vpow.pop %v1744
        %v1746 = vsel %vm1525, %v1739, 0.0
        %1747 = vadd.xlane.f32.xlu0 %v1746
        %v1748 = vpop.xlane.xlu0 %1747
        %v1749 = vsel %vm1525, %v1741, 0.0
        %1750 = vadd.xlane.f32.xlu0 %v1749
        %v1751 = vpop.xlane.xlu0 %1750
        %v1752 = vsel %vm1525, %v1743, 0.0
        %1753 = vadd.xlane.f32.xlu0 %v1752
        %v1754 = vpop.xlane.xlu0 %1753
        %v1755 = vsel %vm1525, %v1745, 0.0
        %1756 = vadd.xlane.f32.xlu0 %v1755
        %v1757 = vpop.xlane.xlu0 %1756
        %v1758 = vrcp.pop %v1748
        %v1759 = vrcp.pop %v1751
        %v1760 = vrcp.pop %v1754
        %v1761 = vrcp.pop %v1757
        %v1762 = vmul.f32 %v1739, %v1758
        %v1763 = vmul.f32 %v1741, %v1759
        %v1764 = vmul.f32 %v1743, %v1760
        %v1765 = vmul.f32 %v1745, %v1761
        %v1766 = vpack.c.bf16 %v1762, %v1762
        %v1767 = vpack.c.bf16 %v1763, %v1763
        %v1768 = vpack.c.bf16 %v1764, %v1764
        %v1769 = vpack.c.bf16 %v1765, %v1765
        %v1771 = vsel %vm1525, %v1766, 0
        %vm1773 = vcmask 1043456
        %v1775 = vsel %vm1773, %v1515, 0
        %1777 = vmatprep.subr.bf16.mxu0 0
        %1778 = vmatpush1.bf16.msra.mxu0 %v1775
        %1779 = vmatprep.subr.bf16.mxu0 0
        %1780 = vmatpush1.bf16.msra.mxu0 0
        %1781 = vmatprep.subr.bf16.mxu0 0
        %1782 = vmatpush1.bf16.msra.mxu0 0
        %1783 = vmatprep.subr.bf16.mxu0 0
        %1784 = vmatpush1.bf16.msra.mxu0 0
        %1785 = vmatprep.subr.bf16.mxu0 0
        %1786 = vmatpush1.bf16.msra.mxu0 0
        %1787 = vmatprep.subr.bf16.mxu0 0
        %1788 = vmatpush1.bf16.msra.mxu0 0
        %1789 = vmatprep.subr.bf16.mxu0 0
        %1790 = vmatpush1.bf16.msra.mxu0 0
        %1791 = vmatprep.subr.bf16.mxu0 0
        %1792 = vmatpush1.bf16.msra.mxu0 0
        %1793 = vmatprep.subr.bf16.mxu0 0
        %1794 = vmatpush1.bf16.msra.mxu0 0
        %1795 = vmatprep.subr.bf16.mxu0 0
        %1796 = vmatpush1.bf16.msra.mxu0 0
        %1797 = vmatprep.subr.bf16.mxu0 0
        %1798 = vmatpush1.bf16.msra.mxu0 0
        %1799 = vmatprep.subr.bf16.mxu0 0
        %1800 = vmatpush1.bf16.msra.mxu0 0
        %1801 = vmatprep.subr.bf16.mxu0 0
        %1802 = vmatpush1.bf16.msra.mxu0 0
        %1803 = vmatprep.subr.bf16.mxu0 0
        %1804 = vmatpush1.bf16.msra.mxu0 0
        %1805 = vmatprep.subr.bf16.mxu0 0
        %1806 = vmatpush1.bf16.msra.mxu0 0
        %1807 = vmatprep.subr.bf16.mxu0 0
        %1808 = vmatpush1.bf16.msra.mxu0 0
        %1809 = vmatprep.mubr.bf16.mxu0 0
        %1810 = vmatmul.mubr.bf16.gmra.mrb[0].mxu0 %v1771
        %v1811 = vpop.f32.mrb[0].mxu0
        %v1812 = vadd.f32 0.0, %v1811
        %v1813 = vpop.f32.mrb[0].mxu0
        %v1814 = vpop.f32.mrb[0].mxu0
        %v1815 = vpop.f32.mrb[0].mxu0
        %1816 = vdwg.mxu0
        %v1818 = vsel %vm1525, %v1767, 0
        %v1821 = vsel %vm1773, %v1518, 0
        %1823 = vmatprep.subr.bf16.mxu0 0
        %1824 = vmatpush1.bf16.msra.mxu0 %v1821
        %1825 = vmatprep.subr.bf16.mxu0 0
        %1826 = vmatpush1.bf16.msra.mxu0 0
        %1827 = vmatprep.subr.bf16.mxu0 0
        %1828 = vmatpush1.bf16.msra.mxu0 0
        %1829 = vmatprep.subr.bf16.mxu0 0
        %1830 = vmatpush1.bf16.msra.mxu0 0
        %1831 = vmatprep.subr.bf16.mxu0 0
        %1832 = vmatpush1.bf16.msra.mxu0 0
        %1833 = vmatprep.subr.bf16.mxu0 0
        %1834 = vmatpush1.bf16.msra.mxu0 0
        %1835 = vmatprep.subr.bf16.mxu0 0
        %1836 = vmatpush1.bf16.msra.mxu0 0
        %1837 = vmatprep.subr.bf16.mxu0 0
        %1838 = vmatpush1.bf16.msra.mxu0 0
        %1839 = vmatprep.subr.bf16.mxu0 0
        %1840 = vmatpush1.bf16.msra.mxu0 0
        %1841 = vmatprep.subr.bf16.mxu0 0
        %1842 = vmatpush1.bf16.msra.mxu0 0
        %1843 = vmatprep.subr.bf16.mxu0 0
        %1844 = vmatpush1.bf16.msra.mxu0 0
        %1845 = vmatprep.subr.bf16.mxu0 0
        %1846 = vmatpush1.bf16.msra.mxu0 0
        %1847 = vmatprep.subr.bf16.mxu0 0
        %1848 = vmatpush1.bf16.msra.mxu0 0
        %1849 = vmatprep.subr.bf16.mxu0 0
        %1850 = vmatpush1.bf16.msra.mxu0 0
        %1851 = vmatprep.subr.bf16.mxu0 0
        %1852 = vmatpush1.bf16.msra.mxu0 0
        %1853 = vmatprep.subr.bf16.mxu0 0
        %1854 = vmatpush1.bf16.msra.mxu0 0
        %1855 = vmatprep.mubr.bf16.mxu0 0
        %1856 = vmatmul.mubr.bf16.gmra.mrb[0].mxu0 %v1818
        %v1857 = vpop.f32.mrb[0].mxu0
        %v1858 = vadd.f32 0.0, %v1857
        %v1859 = vpop.f32.mrb[0].mxu0
        %v1860 = vpop.f32.mrb[0].mxu0
        %v1861 = vpop.f32.mrb[0].mxu0
        %1862 = vdwg.mxu0
        %v1864 = vsel %vm1525, %v1768, 0
        %v1867 = vsel %vm1773, %v1521, 0
        %1869 = vmatprep.subr.bf16.mxu0 0
        %1870 = vmatpush1.bf16.msra.mxu0 %v1867
        %1871 = vmatprep.subr.bf16.mxu0 0
        %1872 = vmatpush1.bf16.msra.mxu0 0
        %1873 = vmatprep.subr.bf16.mxu0 0
        %1874 = vmatpush1.bf16.msra.mxu0 0
        %1875 = vmatprep.subr.bf16.mxu0 0
        %1876 = vmatpush1.bf16.msra.mxu0 0
        %1877 = vmatprep.subr.bf16.mxu0 0
        %1878 = vmatpush1.bf16.msra.mxu0 0
        %1879 = vmatprep.subr.bf16.mxu0 0
        %1880 = vmatpush1.bf16.msra.mxu0 0
        %1881 = vmatprep.subr.bf16.mxu0 0
        %1882 = vmatpush1.bf16.msra.mxu0 0
        %1883 = vmatprep.subr.bf16.mxu0 0
        %1884 = vmatpush1.bf16.msra.mxu0 0
        %1885 = vmatprep.subr.bf16.mxu0 0
        %1886 = vmatpush1.bf16.msra.mxu0 0
        %1887 = vmatprep.subr.bf16.mxu0 0
        %1888 = vmatpush1.bf16.msra.mxu0 0
        %1889 = vmatprep.subr.bf16.mxu0 0
        %1890 = vmatpush1.bf16.msra.mxu0 0
        %1891 = vmatprep.subr.bf16.mxu0 0
        %1892 = vmatpush1.bf16.msra.mxu0 0
        %1893 = vmatprep.subr.bf16.mxu0 0
        %1894 = vmatpush1.bf16.msra.mxu0 0
        %1895 = vmatprep.subr.bf16.mxu0 0
        %1896 = vmatpush1.bf16.msra.mxu0 0
        %1897 = vmatprep.subr.bf16.mxu0 0
        %1898 = vmatpush1.bf16.msra.mxu0 0
        %1899 = vmatprep.subr.bf16.mxu0 0
        %1900 = vmatpush1.bf16.msra.mxu0 0
        %1901 = vmatprep.mubr.bf16.mxu0 0
        %1902 = vmatmul.mubr.bf16.gmra.mrb[0].mxu0 %v1864
        %v1903 = vpop.f32.mrb[0].mxu0
        %v1904 = vadd.f32 0.0, %v1903
        %v1905 = vpop.f32.mrb[0].mxu0
        %v1906 = vpop.f32.mrb[0].mxu0
        %v1907 = vpop.f32.mrb[0].mxu0
        %1908 = vdwg.mxu0
        %v1910 = vsel %vm1525, %v1769, 0
        %v1913 = vsel %vm1773, %v1524, 0
        %1915 = vmatprep.subr.bf16.mxu0 0
        %1916 = vmatpush1.bf16.msra.mxu0 %v1913
        %1917 = vmatprep.subr.bf16.mxu0 0
        %1918 = vmatpush1.bf16.msra.mxu0 0
        %1919 = vmatprep.subr.bf16.mxu0 0
        %1920 = vmatpush1.bf16.msra.mxu0 0
        %1921 = vmatprep.subr.bf16.mxu0 0
        %1922 = vmatpush1.bf16.msra.mxu0 0
        %1923 = vmatprep.subr.bf16.mxu0 0
        %1924 = vmatpush1.bf16.msra.mxu0 0
        %1925 = vmatprep.subr.bf16.mxu0 0
        %1926 = vmatpush1.bf16.msra.mxu0 0
        %1927 = vmatprep.subr.bf16.mxu0 0
        %1928 = vmatpush1.bf16.msra.mxu0 0
        %1929 = vmatprep.subr.bf16.mxu0 0
        %1930 = vmatpush1.bf16.msra.mxu0 0
        %1931 = vmatprep.subr.bf16.mxu0 0
        %1932 = vmatpush1.bf16.msra.mxu0 0
        %1933 = vmatprep.subr.bf16.mxu0 0
        %1934 = vmatpush1.bf16.msra.mxu0 0
        %1935 = vmatprep.subr.bf16.mxu0 0
        %1936 = vmatpush1.bf16.msra.mxu0 0
        %1937 = vmatprep.subr.bf16.mxu0 0
        %1938 = vmatpush1.bf16.msra.mxu0 0
        %1939 = vmatprep.subr.bf16.mxu0 0
        %1940 = vmatpush1.bf16.msra.mxu0 0
        %1941 = vmatprep.subr.bf16.mxu0 0
        %1942 = vmatpush1.bf16.msra.mxu0 0
        %1943 = vmatprep.subr.bf16.mxu0 0
        %1944 = vmatpush1.bf16.msra.mxu0 0
        %1945 = vmatprep.subr.bf16.mxu0 0
        %1946 = vmatpush1.bf16.msra.mxu0 0
        %1947 = vmatprep.mubr.bf16.mxu0 0
        %1948 = vmatmul.mubr.bf16.gmra.mrb[0].mxu0 %v1910
        %v1949 = vpop.f32.mrb[0].mxu0
        %v1950 = vadd.f32 0.0, %v1949
        %v1951 = vpop.f32.mrb[0].mxu0
        %v1952 = vpop.f32.mrb[0].mxu0
        %v1953 = vpop.f32.mrb[0].mxu0
        %1954 = vdwg.mxu0
        %v1955 = vpack.c.bf16 %v1812, %v1812
        %v1956 = vpack.c.bf16 %v1858, %v1858
        %v1957 = vpack.c.bf16 %v1904, %v1904
        %v1958 = vpack.c.bf16 %v1950, %v1950
        %v1959 = vld [vmem:[%s9] sm:$0xf]
        %s1960 = scalar_lea.vmem %s9, 4
        %v1961 = vld [vmem:[%s1960] sm:$0xf]
        %v1963 = vsel %vm1525, %v1956, 0
        %v1966 = vsel %vm1773, %v1961, 0
        %1968 = vmatprep.subr.bf16.mxu0 0
        %1969 = vmatpush1.bf16.msra.mxu0 %v1966
        %1970 = vmatprep.subr.bf16.mxu0 0
        %1971 = vmatpush1.bf16.msra.mxu0 0
        %1972 = vmatprep.subr.bf16.mxu0 0
        %1973 = vmatpush1.bf16.msra.mxu0 0
        %1974 = vmatprep.subr.bf16.mxu0 0
        %1975 = vmatpush1.bf16.msra.mxu0 0
        %1976 = vmatprep.subr.bf16.mxu0 0
        %1977 = vmatpush1.bf16.msra.mxu0 0
        %1978 = vmatprep.subr.bf16.mxu0 0
        %1979 = vmatpush1.bf16.msra.mxu0 0
        %1980 = vmatprep.subr.bf16.mxu0 0
        %1981 = vmatpush1.bf16.msra.mxu0 0
        %1982 = vmatprep.subr.bf16.mxu0 0
        %1983 = vmatpush1.bf16.msra.mxu0 0
        %1984 = vmatprep.subr.bf16.mxu0 0
        %1985 = vmatpush1.bf16.msra.mxu0 0
        %1986 = vmatprep.subr.bf16.mxu0 0
        %1987 = vmatpush1.bf16.msra.mxu0 0
        %1988 = vmatprep.subr.bf16.mxu0 0
        %1989 = vmatpush1.bf16.msra.mxu0 0
        %1990 = vmatprep.subr.bf16.mxu0 0
        %1991 = vmatpush1.bf16.msra.mxu0 0
        %1992 = vmatprep.subr.bf16.mxu0 0
        %1993 = vmatpush1.bf16.msra.mxu0 0
        %1994 = vmatprep.subr.bf16.mxu0 0
        %1995 = vmatpush1.bf16.msra.mxu0 0
        %1996 = vmatprep.subr.bf16.mxu0 0
        %1997 = vmatpush1.bf16.msra.mxu0 0
        %1998 = vmatprep.subr.bf16.mxu0 0
        %1999 = vmatpush1.bf16.msra.mxu0 0
        %2000 = vmatprep.mubr.bf16.mxu0 0
        %2001 = vmatmul.mubr.bf16.gmra.mrb[0].mxu0 %v1963
        %v2002 = vpop.f32.mrb[0].mxu0
        %v2003 = vadd.f32 0.0, %v2002
        %v2004 = vpop.f32.mrb[0].mxu0
        %v2005 = vpop.f32.mrb[0].mxu0
        %v2006 = vpop.f32.mrb[0].mxu0
        %2007 = vdwg.mxu0
        %v2009 = vsel %vm1525, %v1955, 0
        %v2012 = vsel %vm1773, %v1959, 0
        %2014 = vmatprep.subr.bf16.mxu0 0
        %2015 = vmatpush1.bf16.msra.mxu0 %v2012
        %2016 = vmatprep.subr.bf16.mxu0 0
        %2017 = vmatpush1.bf16.msra.mxu0 0
        %2018 = vmatprep.subr.bf16.mxu0 0
        %2019 = vmatpush1.bf16.msra.mxu0 0
        %2020 = vmatprep.subr.bf16.mxu0 0
        %2021 = vmatpush1.bf16.msra.mxu0 0
        %2022 = vmatprep.subr.bf16.mxu0 0
        %2023 = vmatpush1.bf16.msra.mxu0 0
        %2024 = vmatprep.subr.bf16.mxu0 0
        %2025 = vmatpush1.bf16.msra.mxu0 0
        %2026 = vmatprep.subr.bf16.mxu0 0
        %2027 = vmatpush1.bf16.msra.mxu0 0
        %2028 = vmatprep.subr.bf16.mxu0 0
        %2029 = vmatpush1.bf16.msra.mxu0 0
        %2030 = vmatprep.subr.bf16.mxu0 0
        %2031 = vmatpush1.bf16.msra.mxu0 0
        %2032 = vmatprep.subr.bf16.mxu0 0
        %2033 = vmatpush1.bf16.msra.mxu0 0
        %2034 = vmatprep.subr.bf16.mxu0 0
        %2035 = vmatpush1.bf16.msra.mxu0 0
        %2036 = vmatprep.subr.bf16.mxu0 0
        %2037 = vmatpush1.bf16.msra.mxu0 0
        %2038 = vmatprep.subr.bf16.mxu0 0
        %2039 = vmatpush1.bf16.msra.mxu0 0
        %2040 = vmatprep.subr.bf16.mxu0 0
        %2041 = vmatpush1.bf16.msra.mxu0 0
        %2042 = vmatprep.subr.bf16.mxu0 0
        %2043 = vmatpush1.bf16.msra.mxu0 0
        %2044 = vmatprep.subr.bf16.mxu0 0
        %2045 = vmatpush1.bf16.msra.mxu0 0
        %2046 = vmatprep.mubr.bf16.mxu0 0
        %2047 = vmatmul.mubr.bf16.gmra.mrb[0].mxu0 %v2009
        %v2048 = vpop.f32.mrb[0].mxu0
        %v2049 = vadd.f32 %v2003, %v2048
        %v2050 = vpop.f32.mrb[0].mxu0
        %v2051 = vpop.f32.mrb[0].mxu0
        %v2052 = vpop.f32.mrb[0].mxu0
        %2053 = vdwg.mxu0
        %s2054 = scalar_lea.vmem %s9, 8
        %v2055 = vld [vmem:[%s2054] sm:$0xf]
        %v2057 = vsel %vm1525, %v1957, 0
        %v2060 = vsel %vm1773, %v2055, 0
        %2062 = vmatprep.subr.bf16.mxu0 0
        %2063 = vmatpush1.bf16.msra.mxu0 %v2060
        %2064 = vmatprep.subr.bf16.mxu0 0
        %2065 = vmatpush1.bf16.msra.mxu0 0
        %2066 = vmatprep.subr.bf16.mxu0 0
        %2067 = vmatpush1.bf16.msra.mxu0 0
        %2068 = vmatprep.subr.bf16.mxu0 0
        %2069 = vmatpush1.bf16.msra.mxu0 0
        %2070 = vmatprep.subr.bf16.mxu0 0
        %2071 = vmatpush1.bf16.msra.mxu0 0
        %2072 = vmatprep.subr.bf16.mxu0 0
        %2073 = vmatpush1.bf16.msra.mxu0 0
        %2074 = vmatprep.subr.bf16.mxu0 0
        %2075 = vmatpush1.bf16.msra.mxu0 0
        %2076 = vmatprep.subr.bf16.mxu0 0
        %2077 = vmatpush1.bf16.msra.mxu0 0
        %2078 = vmatprep.subr.bf16.mxu0 0
        %2079 = vmatpush1.bf16.msra.mxu0 0
        %2080 = vmatprep.subr.bf16.mxu0 0
        %2081 = vmatpush1.bf16.msra.mxu0 0
        %2082 = vmatprep.subr.bf16.mxu0 0
        %2083 = vmatpush1.bf16.msra.mxu0 0
        %2084 = vmatprep.subr.bf16.mxu0 0
        %2085 = vmatpush1.bf16.msra.mxu0 0
        %2086 = vmatprep.subr.bf16.mxu0 0
        %2087 = vmatpush1.bf16.msra.mxu0 0
        %2088 = vmatprep.subr.bf16.mxu0 0
        %2089 = vmatpush1.bf16.msra.mxu0 0
        %2090 = vmatprep.subr.bf16.mxu0 0
        %2091 = vmatpush1.bf16.msra.mxu0 0
        %2092 = vmatprep.subr.bf16.mxu0 0
        %2093 = vmatpush1.bf16.msra.mxu0 0
        %2094 = vmatprep.mubr.bf16.mxu0 0
        %2095 = vmatmul.mubr.bf16.gmra.mrb[0].mxu0 %v2057
        %v2096 = vpop.f32.mrb[0].mxu0
        %v2097 = vadd.f32 0.0, %v2096
        %v2098 = vpop.f32.mrb[0].mxu0
        %v2099 = vpop.f32.mrb[0].mxu0
        %v2100 = vpop.f32.mrb[0].mxu0
        %2101 = vdwg.mxu0
        %v2102 = vadd.f32 %v2049, %v2097
        %s2103 = scalar_lea.vmem %s9, 12
        %v2104 = vld [vmem:[%s2103] sm:$0xf]
        %v2106 = vsel %vm1525, %v1958, 0
        %v2109 = vsel %vm1773, %v2104, 0
        %2111 = vmatprep.subr.bf16.mxu0 0
        %2112 = vmatpush1.bf16.msra.mxu0 %v2109
        %2113 = vmatprep.subr.bf16.mxu0 0
        %2114 = vmatpush1.bf16.msra.mxu0 0
        %2115 = vmatprep.subr.bf16.mxu0 0
        %2116 = vmatpush1.bf16.msra.mxu0 0
        %2117 = vmatprep.subr.bf16.mxu0 0
        %2118 = vmatpush1.bf16.msra.mxu0 0
        %2119 = vmatprep.subr.bf16.mxu0 0
        %2120 = vmatpush1.bf16.msra.mxu0 0
        %2121 = vmatprep.subr.bf16.mxu0 0
        %2122 = vmatpush1.bf16.msra.mxu0 0
        %2123 = vmatprep.subr.bf16.mxu0 0
        %2124 = vmatpush1.bf16.msra.mxu0 0
        %2125 = vmatprep.subr.bf16.mxu0 0
        %2126 = vmatpush1.bf16.msra.mxu0 0
        %2127 = vmatprep.subr.bf16.mxu0 0
        %2128 = vmatpush1.bf16.msra.mxu0 0
        %2129 = vmatprep.subr.bf16.mxu0 0
        %2130 = vmatpush1.bf16.msra.mxu0 0
        %2131 = vmatprep.subr.bf16.mxu0 0
        %2132 = vmatpush1.bf16.msra.mxu0 0
        %2133 = vmatprep.subr.bf16.mxu0 0
        %2134 = vmatpush1.bf16.msra.mxu0 0
        %2135 = vmatprep.subr.bf16.mxu0 0
        %2136 = vmatpush1.bf16.msra.mxu0 0
        %2137 = vmatprep.subr.bf16.mxu0 0
        %2138 = vmatpush1.bf16.msra.mxu0 0
        %2139 = vmatprep.subr.bf16.mxu0 0
        %2140 = vmatpush1.bf16.msra.mxu0 0
        %2141 = vmatprep.subr.bf16.mxu0 0
        %2142 = vmatpush1.bf16.msra.mxu0 0
        %2143 = vmatprep.mubr.bf16.mxu0 0
        %2144 = vmatmul.mubr.bf16.gmra.mrb[0].mxu0 %v2106
        %v2145 = vpop.f32.mrb[0].mxu0
        %v2146 = vadd.f32 0.0, %v2145
        %v2147 = vpop.f32.mrb[0].mxu0
        %v2148 = vpop.f32.mrb[0].mxu0
        %v2149 = vpop.f32.mrb[0].mxu0
        %2150 = vdwg.mxu0
        %v2151 = vadd.f32 %v2102, %v2146
        %v2152 = vld [vmem:[#allocation11] sm:$0x1]
        %v2154 = vlaneseq
        %v2155 = vshrl.u32 %v2154, 7
        %v2156 = vsub.s32 0, %v2155
        %v2157 = vrot.slane %v2152, %v2156
        %v2159 = vadd.f32 %v2151, %v2157
        %v2160 = vadd.f32 %v788, %v2159
        %v2161 = vsel %vm790, %v2160, 0.0
        %2162 = vadd.xlane.f32.xlu0 %v2161
        %v2163 = vpop.xlane.xlu0 %2162
        %v2164 = vmul.f32 %v2163, %v794
        %v2165 = vsub.f32 %v2160, %v2164
        %v2166 = vmul.f32 %v2165, %v2165
        %v2167 = vsel %vm790, %v2166, 0.0
        %2168 = vadd.xlane.f32.xlu0 %v2167
        %v2169 = vpop.xlane.xlu0 %2168
        %v2170 = vmul.f32 %v2169, %v794
        %v2171 = vadd.f32 %v2170, 1e-06
        %v2172 = vrsqrt.pop %v2171
        %v2173 = vmul.f32 %v2165, %v2172
        %v2174 = vld [vmem:[#allocation16] sm:$0x1]
        %v2176 = vlaneseq
        %v2177 = vshrl.u32 %v2176, 7
        %v2178 = vsub.s32 0, %v2177
        %v2179 = vrot.slane %v2174, %v2178
        %v2181 = vmul.f32 %v2173, %v2179
        %v2182 = vld [vmem:[%s14] sm:$0x1]
        %v2184 = vlaneseq
        %v2185 = vshrl.u32 %v2184, 7
        %v2186 = vsub.s32 0, %v2185
        %v2187 = vrot.slane %v2182, %v2186
        %v2189 = vadd.f32 %v2181, %v2187
        %v2190 = vpack.c.bf16 %v2189, %v2189
        %v2191 = vld [vmem:[%s15] sm:$0xf]
        %v2192 = vld [vmem:[%s15 + $0x4] sm:$0xf]
        %v2193 = vld [vmem:[%s15 + $0x8] sm:$0xf]
        %v2194 = vld [vmem:[%s15 + $0xc] sm:$0xf]
        %v2195 = vld [vmem:[%s16] sm:$0x1]
        %v2197 = vlaneseq
        %v2198 = vshrl.u32 %v2197, 7
        %v2199 = vsub.s32 0, %v2198
        %v2200 = vrot.slane %v2195, %v2199
        %v2206 = vunpack.c.l.b16 %v2191
        %v2207 = vunpack.c.l.b16 %v2192
        %v2208 = vunpack.c.l.b16 %v2193
        %v2209 = vunpack.c.l.b16 %v2194
        %v2210 = vpack.c.b16 %v2207, %v2206
        %v2211 = vpack.c.b16 %v2209, %v2208
        %v2215 = vsel %vm790, %v2190, 0
        %2217 = vmatprep.subr.bf16.mxu0 0
        %2218 = vmatpush1.bf16.msra.mxu0 %v2210
        %2219 = vmatprep.subr.bf16.mxu0 0
        %2220 = vmatpush1.bf16.msra.mxu0 %v2211
        %2221 = vmatprep.subr.bf16.mxu0 0
        %2222 = vmatpush1.bf16.msra.mxu0 0
        %2223 = vmatprep.subr.bf16.mxu0 0
        %2224 = vmatpush1.bf16.msra.mxu0 0
        %2225 = vmatprep.subr.bf16.mxu0 0
        %2226 = vmatpush1.bf16.msra.mxu0 0
        %2227 = vmatprep.subr.bf16.mxu0 0
        %2228 = vmatpush1.bf16.msra.mxu0 0
        %2229 = vmatprep.subr.bf16.mxu0 0
        %2230 = vmatpush1.bf16.msra.mxu0 0
        %2231 = vmatprep.subr.bf16.mxu0 0
        %2232 = vmatpush1.bf16.msra.mxu0 0
        %2233 = vmatprep.subr.bf16.mxu0 0
        %2234 = vmatpush1.bf16.msra.mxu0 0
        %2235 = vmatprep.subr.bf16.mxu0 0
        %2236 = vmatpush1.bf16.msra.mxu0 0
        %2237 = vmatprep.subr.bf16.mxu0 0
        %2238 = vmatpush1.bf16.msra.mxu0 0
        %2239 = vmatprep.subr.bf16.mxu0 0
        %2240 = vmatpush1.bf16.msra.mxu0 0
        %2241 = vmatprep.subr.bf16.mxu0 0
        %2242 = vmatpush1.bf16.msra.mxu0 0
        %2243 = vmatprep.subr.bf16.mxu0 0
        %2244 = vmatpush1.bf16.msra.mxu0 0
        %2245 = vmatprep.subr.bf16.mxu0 0
        %2246 = vmatpush1.bf16.msra.mxu0 0
        %2247 = vmatprep.subr.bf16.mxu0 0
        %2248 = vmatpush1.bf16.msra.mxu0 0
        %2249 = vmatprep.mubr.bf16.mxu0 0
        %2250 = vmatmul.mubr.bf16.gmra.mrb[0].mxu0 %v2215
        %v2251 = vpop.f32.mrb[0].mxu0
        %v2252 = vadd.f32 %v2200, %v2251
        %v2253 = vpop.f32.mrb[0].mxu0
        %v2254 = vpop.f32.mrb[0].mxu0
        %v2255 = vpop.f32.mrb[0].mxu0
        %2256 = vdwg.mxu0
        %v2257 = vmax.f32 %v2252, 0.0
        %v2258 = vpack.c.bf16 %v2257, %v2257
        %v2259 = vld [vmem:[%s17] sm:$0xf]
        %v2260 = vld [vmem:[%s17 + $0x4] sm:$0xf]
        %v2261 = vld [vmem:[%s17 + $0x8] sm:$0xf]
        %v2262 = vld [vmem:[%s17 + $0xc] sm:$0xf]
        %v2263 = vld [vmem:[%s17 + $0x10] sm:$0xf]
        %v2264 = vld [vmem:[%s17 + $0x14] sm:$0xf]
        %v2265 = vld [vmem:[%s17 + $0x18] sm:$0xf]
        %v2266 = vld [vmem:[%s17 + $0x1c] sm:$0xf]
        %v2267 = vld [vmem:[%s18] sm:$0x1]
        %v2269 = vlaneseq
        %v2270 = vshrl.u32 %v2269, 7
        %v2271 = vsub.s32 0, %v2270
        %v2272 = vrot.slane %v2267, %v2271
        %v2282 = vunpack.c.l.b16 %v2259
        %v2283 = vunpack.c.l.b16 %v2260
        %v2284 = vunpack.c.l.b16 %v2261
        %v2285 = vunpack.c.l.b16 %v2262
        %v2286 = vunpack.c.l.b16 %v2263
        %v2287 = vunpack.c.l.b16 %v2264
        %v2288 = vunpack.c.l.b16 %v2265
        %v2289 = vunpack.c.l.b16 %v2266
        %v2290 = vpack.c.b16 %v2283, %v2282
        %v2291 = vpack.c.b16 %v2285, %v2284
        %v2292 = vpack.c.b16 %v2287, %v2286
        %v2293 = vpack.c.b16 %v2289, %v2288
        %vm2298 = vcmask 523264
        %v2300 = vsel %vm2298, %v2258, 0
        %2302 = vmatprep.subr.bf16.mxu0 0
        %2303 = vmatpush1.bf16.msra.mxu0 %v2290
        %2304 = vmatprep.subr.bf16.mxu0 0
        %2305 = vmatpush1.bf16.msra.mxu0 %v2291
        %2306 = vmatprep.subr.bf16.mxu0 0
        %2307 = vmatpush1.bf16.msra.mxu0 %v2292
        %2308 = vmatprep.subr.bf16.mxu0 0
        %2309 = vmatpush1.bf16.msra.mxu0 %v2293
        %2310 = vmatprep.subr.bf16.mxu0 0
        %2311 = vmatpush1.bf16.msra.mxu0 0
        %2312 = vmatprep.subr.bf16.mxu0 0
        %2313 = vmatpush1.bf16.msra.mxu0 0
        %2314 = vmatprep.subr.bf16.mxu0 0
        %2315 = vmatpush1.bf16.msra.mxu0 0
        %2316 = vmatprep.subr.bf16.mxu0 0
        %2317 = vmatpush1.bf16.msra.mxu0 0
        %2318 = vmatprep.subr.bf16.mxu0 0
        %2319 = vmatpush1.bf16.msra.mxu0 0
        %2320 = vmatprep.subr.bf16.mxu0 0
        %2321 = vmatpush1.bf16.msra.mxu0 0
        %2322 = vmatprep.subr.bf16.mxu0 0
        %2323 = vmatpush1.bf16.msra.mxu0 0
        %2324 = vmatprep.subr.bf16.mxu0 0
        %2325 = vmatpush1.bf16.msra.mxu0 0
        %2326 = vmatprep.subr.bf16.mxu0 0
        %2327 = vmatpush1.bf16.msra.mxu0 0
        %2328 = vmatprep.subr.bf16.mxu0 0
        %2329 = vmatpush1.bf16.msra.mxu0 0
        %2330 = vmatprep.subr.bf16.mxu0 0
        %2331 = vmatpush1.bf16.msra.mxu0 0
        %2332 = vmatprep.subr.bf16.mxu0 0
        %2333 = vmatpush1.bf16.msra.mxu0 0
        %2334 = vmatprep.mubr.bf16.mxu0 0
        %2335 = vmatmul.mubr.bf16.gmra.mrb[0].mxu0 %v2300
        %v2336 = vpop.f32.mrb[0].mxu0
        %v2337 = vadd.f32 %v2272, %v2336
        %v2338 = vpop.f32.mrb[0].mxu0
        %v2339 = vpop.f32.mrb[0].mxu0
        %v2340 = vpop.f32.mrb[0].mxu0
        %2341 = vdwg.mxu0
        %v2342 = vadd.f32 %v2160, %v2337
        %2343 = vst.msk [vmem:[%s775] sm:$0xff] %vm790, %v2342
        %s2344 = sand.u32 %s480, 1
        %s2345 = scalar_lea.sflag [#allocation4], %s2344
        %s2346 = sand.u32 %s480, 1
        %s2347 = smul.addr %s2346, 8
        %s2348 = scalar_lea.vmem [#allocation17], %s2347
        // Predicated region
        $region133: #{tpu_custom_call.1} parent=95 // pred_check
          %p2349 = pneg %p490
        $region134: #{tpu_custom_call.1} parent=95 // pred_check_branch
          %2351 = sbr.rel (%p2349) target = $region136
        $region135: #{tpu_custom_call.1} parent=95 // pred_region
          %s2353 = ssub.s32 128, 128
          %2354 = vsyncadd %s2345, %s2353
          %s2355 = sadd.s32 %s45, %s44
          %s2356 = smul.addr %s2355, 128
          %s2357 = scalar_lea.hbm %s19, %s2356
          %s2359 = sshll.u32 %s2348, 4
          %s2360 = int_to_ptr.vmem [resolvable:$true] %s2359
          %2362 = dma.vmem_to_hbm [thread:$0]  %s2360, 128, %s2357, %s2345
        $region136: #{tpu_custom_call.1} parent=95 // pred_fallthru
          _
      $region96: #{tpu_custom_call.1} parent=5 // pred_fallthru
        _
      %p2363 = scmp.le.s32.totalorder 2, %s35
      // Predicated region
      $region137: #{tpu_custom_call.1} parent=5 // pred_check
        %p2364 = pneg %p2363
      $region138: #{tpu_custom_call.1} parent=5 // pred_check_branch
        %2366 = sbr.rel (%p2364) target = $region140
      $region139: #{tpu_custom_call.1} parent=5 // pred_region
        %s2367 = ssub.s32 %s35, 2
        // Predicated region
        $region141: #{tpu_custom_call.1} parent=139 // pred_check
          %p2368 = pneg %p496
        $region142: #{tpu_custom_call.1} parent=139 // pred_check_branch
          %2370 = sbr.rel (%p2368) target = $region144
        $region143: #{tpu_custom_call.1} parent=139 // pred_region
          %s2371 = sand.u32 %s481, 1
          %s2372 = scalar_lea.sflag [#allocation4], %s2371
          %s2373 = sand.u32 %s481, 1
          %s2374 = smul.addr %s2373, 8
          %s2375 = scalar_lea.vmem [#allocation17], %s2374
          %2376 = dma.done %s2372, 128
        $region144: #{tpu_custom_call.1} parent=139 // pred_fallthru
          _
      $region140: #{tpu_custom_call.1} parent=5 // pred_fallthru
        _
    $region6: #{tpu_custom_call.1} parent=1 // loop_footer
      %s39 = sadd.s32 1, %s35
    $region7: #{tpu_custom_call.1} parent=1 // loop_footer_branch
      %34 = sbr.rel target = $region3
    $region8: #{tpu_custom_call.1} parent=1 // loop_exit
      _
    %2377 = vsyncpa [#allocation3], 1
    %s2378 = scalar_lea.sflag [#allocation3], 1
    %2379 = vsyncpa %s2378, 1
    %2380 = vsyncpa [#allocation6], 1
    %2381 = vsyncpa [#allocation9], 1
    %2382 = vsyncpa [#allocation12], 1
    %2383 = vsyncpa [#allocation15], 1
    %2384 = vsyncpa [#allocation4], 1
    %s2385 = scalar_lea.sflag [#allocation4], 1
    %2386 = vsyncpa %s2385, 1

</llo_original>
